<compile_context>
chip_gen: v7x
topology: tpu7x:2x2x1
jax: 0.10.0
libtpu: 0.0.40
codegen_flags: <defaults>
</compile_context>

<pallas_src>
import functools

import jax
import jax.numpy as jnp
from jax.experimental import pallas as pl
from jax.experimental.pallas import tpu as pltpu


def _cross_mha_kernel(x_ref, enc_ref, wq_ref, bq_ref, wkv_ref, bkv_ref, o_ref,
                      *, n_heads, head_dim, scale):
    # Block shapes:
    #   x_ref   : (Bt, S, D)    enc_ref : (Bt, T, D)
    #   wq_ref  : (D, D)        bq_ref  : (1, D)
    #   wkv_ref : (D, 2D)       bkv_ref : (1, 2D)
    #   o_ref   : (Bt, S, D)
    Bt, S, D = x_ref.shape
    T = enc_ref.shape[1]

    # ---- Fused full-width projections (MXU, f32 accumulation) --------------
    # (Bt, S, D) -> (Bt*S, D) is a free leading-dim merge; it fills the MXU M
    # dimension with Bt*S rows per push instead of S.
    x2 = x_ref[...].reshape(Bt * S, D)
    e2 = enc_ref[...].reshape(Bt * T, D)

    q = (jnp.dot(x2, wq_ref[...], preferred_element_type=jnp.float32)
         + bq_ref[...]) * scale                                      # (Bt*S, D)
    kv = (jnp.dot(e2, wkv_ref[...], preferred_element_type=jnp.float32)
          + bkv_ref[...])                                            # (Bt*T, 2D)

    # MXU operands in the model dtype (bf16 models get bf16 MXU passes with f32
    # accumulation); softmax statistics stay f32 on every chip generation.
    cdt = x_ref.dtype
    q3 = q.astype(cdt).reshape(Bt, S, D)
    k3 = kv[:, :D].astype(cdt).reshape(Bt, T, D)
    v3 = kv[:, D:].astype(cdt).reshape(Bt, T, D)

    # ---- Per-head attention, batched over the Bt batch elements ------------
    outs = []
    for h in range(n_heads):                       # static -> unrolled
        lo = h * head_dim
        hi = lo + head_dim
        qh = q3[:, :, lo:hi]                       # (Bt, S, hd), already scaled
        kh = k3[:, :, lo:hi]                       # (Bt, T, hd)
        vh = v3[:, :, lo:hi]                       # (Bt, T, hd)

        # QK^T, contracting hd, batched over Bt (no k transpose / relayout).
        s = jnp.einsum("bsd,btd->bst", qh, kh,
                       preferred_element_type=jnp.float32)           # (Bt, S, T)

        # Numerically-stable softmax; normalization deferred past PV.
        s = s - jnp.max(s, axis=-1, keepdims=True)
        p = jnp.exp(s)                                               # f32
        l = jnp.sum(p, axis=-1, keepdims=True)                       # (Bt, S, 1)

        oh = jnp.einsum("bst,btd->bsd", p.astype(cdt), vh,
                        preferred_element_type=jnp.float32)          # (Bt, S, hd)
        # Divide the small (Bt, S, hd) result, not the (Bt, S, T) probs; the
        # approximate reciprocal uses the otherwise-idle EUP slot.
        oh = oh * pl.reciprocal(l, approx=True)
        outs.append(oh)

    # Heads merged back in "merged heads" order; single block store.
    o_ref[...] = jnp.concatenate(outs, axis=-1).astype(o_ref.dtype)


def _pick_block_batch(B, S, target_rows=256):
    """Batch elements per grid step.

    Fill ~target_rows MXU M rows per projection (256 for v6e/v7x; 128 already
    suffices on v5e's 4x128^2 MXU), keep >= 2 grid steps whenever B >= 2 so
    v7x's two TensorCores both get work, and divide B exactly.
    """
    bt = max(1, min(B, target_rows // max(S, 1)))
    if B >= 2:
        bt = min(bt, B // 2)
    bt = max(bt, 1)
    while B % bt:
        bt -= 1
    return bt


def cross_multi_head_attention(x, enc, params, n_heads, *, block_batch=None):
    """x: (B, S, D), enc: (B, T, D). params dict with wq,bq,wkv,bkv in JAX (in,out) layout."""
    B, S, D = x.shape
    _, T, _ = enc.shape
    hd = D // n_heads
    scale = 1.0 / float(hd) ** 0.5

    bt = block_batch or _pick_block_batch(B, S)

    # Weights stay in their stored (model) dtype; no per-call scaling copies.
    wq = params["wq"]                              # (D, D)
    bq = params["bq"].reshape(1, D)                # (1, D)
    wkv = params["wkv"]                            # (D, 2D)
    bkv = params["bkv"].reshape(1, 2 * D)          # (1, 2D)

    kernel = functools.partial(_cross_mha_kernel, n_heads=n_heads, head_dim=hd,
                               scale=scale)

    return pl.pallas_call(
        kernel,
        out_shape=jax.ShapeDtypeStruct((B, S, D), x.dtype),
        grid_spec=pltpu.PrefetchScalarGridSpec(
            num_scalar_prefetch=0,
            grid=(B // bt,),
            in_specs=[
                pl.BlockSpec((bt, S, D), lambda b: (b, 0, 0)),      # x   (per batch-block)
                pl.BlockSpec((bt, T, D), lambda b: (b, 0, 0)),      # enc (per batch-block)
                pl.BlockSpec((D, D), lambda b: (0, 0)),             # Wq   (resident)
                pl.BlockSpec((1, D), lambda b: (0, 0)),             # bq   (resident)
                pl.BlockSpec((D, 2 * D), lambda b: (0, 0)),         # Wkv  (resident)
                pl.BlockSpec((1, 2 * D), lambda b: (0, 0)),         # bkv  (resident)
            ],
            out_specs=pl.BlockSpec((bt, S, D), lambda b: (b, 0, 0)),
        ),
        compiler_params=pltpu.CompilerParams(
            dimension_semantics=("parallel",)),
    )(x, enc, wq, bq, wkv, bkv)


def _reference(x, enc, params, n_heads):
    """Pure-JAX reference mirroring the PyTorch forward (eval mode, attn=None)."""
    B, S, D = x.shape
    hd = D // n_heads
    q = x @ params["wq"] + params["bq"]
    kv = enc @ params["wkv"] + params["bkv"]
    k, v = kv[..., :D], kv[..., D:]
    q = q.reshape(B, S, n_heads, hd).transpose(0, 2, 1, 3)
    k = k.reshape(B, -1, n_heads, hd).transpose(0, 2, 1, 3)
    v = v.reshape(B, -1, n_heads, hd).transpose(0, 2, 1, 3)
    s = jnp.einsum("bhsd,bhtd->bhst", q, k) / jnp.sqrt(jnp.float32(hd))
    p = jax.nn.softmax(s, axis=-1)
    o = jnp.einsum("bhst,bhtd->bhsd", p, v)
    return o.transpose(0, 2, 1, 3).reshape(B, S, D)


if __name__ == "__main__":
    B, S, T = 2, 8, 16
    n_heads, emb_dim = 4, 32

    key = jax.random.PRNGKey(0)
    kx, ke, k1, k2, k3, k4 = jax.random.split(key, 6)

    x = jax.random.normal(kx, (B, S, emb_dim), dtype=jnp.float32)
    enc = jax.random.normal(ke, (B, T, emb_dim), dtype=jnp.float32)

    # Deterministic synthetic parameters (nn.Linear shapes, stored as (in, out)).
    bound = 1.0 / (emb_dim ** 0.5)
    params = {
        "wq": jax.random.uniform(k1, (emb_dim, emb_dim), jnp.float32, -bound, bound),
        "bq": jax.random.uniform(k2, (emb_dim,), jnp.float32, -bound, bound),
        "wkv": jax.random.uniform(k3, (emb_dim, 2 * emb_dim), jnp.float32, -bound, bound),
        "bkv": jax.random.uniform(k4, (2 * emb_dim,), jnp.float32, -bound, bound),
    }

    out = cross_multi_head_attention(x, enc, params, n_heads)
    out = jax.block_until_ready(out)

    ref = _reference(x, enc, params, n_heads)
    assert out.shape == (B, S, emb_dim)
    # Tolerance loosened slightly for the approximate (EUP) reciprocal in the
    # deferred softmax normalization.
    assert jnp.allclose(out, ref, atol=2e-3, rtol=2e-3), "mismatch vs reference"

    print("KERNEL_OK")
</pallas_src>

<mosaic_0001>
module attributes {stable_mosaic.version = 11 : i64} {
  func.func @_cross_mha_kernel(%arg0: i32, %arg1: memref<1x8x32xf32, #tpu.memory_space<vmem>>, %arg2: memref<1x16x32xf32, #tpu.memory_space<vmem>>, %arg3: memref<32x32xf32, #tpu.memory_space<vmem>>, %arg4: memref<1x32xf32, #tpu.memory_space<vmem>>, %arg5: memref<32x64xf32, #tpu.memory_space<vmem>>, %arg6: memref<1x64xf32, #tpu.memory_space<vmem>>, %arg7: memref<1x8x32xf32, #tpu.memory_space<vmem>>) attributes {dimension_semantics = [#tpu.dimension_semantics<parallel>], iteration_bounds = array<i64: 2>, scalar_prefetch = 0 : i64, scratch_operands = 0 : i64, tpu.core_type = #tpu.core_type<tc>, window_params = [{transform_indices = @transform_0, window_bounds = array<i64: 1, 8, 32>}, {transform_indices = @transform_1, window_bounds = array<i64: 1, 16, 32>}, {pipeline_mode = #tpu.pipeline_mode<synchronous>, transform_indices = @transform_2, window_bounds = array<i64: 32, 32>}, {pipeline_mode = #tpu.pipeline_mode<synchronous>, transform_indices = @transform_3, window_bounds = array<i64: 1, 32>}, {pipeline_mode = #tpu.pipeline_mode<synchronous>, transform_indices = @transform_4, window_bounds = array<i64: 32, 64>}, {pipeline_mode = #tpu.pipeline_mode<synchronous>, transform_indices = @transform_5, window_bounds = array<i64: 1, 64>}, {transform_indices = @transform_6, window_bounds = array<i64: 1, 8, 32>}]} {
    %c0 = arith.constant 0 : index
    %c0_0 = arith.constant 0 : index
    %c0_1 = arith.constant 0 : index
    %0 = vector.load %arg1[%c0, %c0_0, %c0_1] : memref<1x8x32xf32, #tpu.memory_space<vmem>>, vector<1x8x32xf32>
    %1 = vector.shape_cast %0 : vector<1x8x32xf32> to vector<8x32xf32>
    %c0_2 = arith.constant 0 : index
    %c0_3 = arith.constant 0 : index
    %c0_4 = arith.constant 0 : index
    %2 = vector.load %arg2[%c0_2, %c0_3, %c0_4] : memref<1x16x32xf32, #tpu.memory_space<vmem>>, vector<1x16x32xf32>
    %3 = vector.shape_cast %2 : vector<1x16x32xf32> to vector<16x32xf32>
    %c0_5 = arith.constant 0 : index
    %c0_6 = arith.constant 0 : index
    %4 = vector.load %arg3[%c0_5, %c0_6] : memref<32x32xf32, #tpu.memory_space<vmem>>, vector<32x32xf32>
    %cst = arith.constant dense<0.000000e+00> : vector<8x32xf32>
    %5 = tpu.matmul %1, %4, %cst {dimension_numbers = #tpu.dot_dimension_numbers<[1], [0], [0], [1], [0, 0, 1, 1], [], []>} : vector<8x32xf32>, vector<32x32xf32>, vector<8x32xf32> -> vector<8x32xf32>
    %c0_7 = arith.constant 0 : index
    %c0_8 = arith.constant 0 : index
    %6 = vector.load %arg4[%c0_7, %c0_8] : memref<1x32xf32, #tpu.memory_space<vmem>>, vector<1x32xf32>
    %7 = vector.broadcast %6 : vector<1x32xf32> to vector<8x32xf32>
    %8 = arith.addf %5, %7 : vector<8x32xf32>
    %cst_9 = arith.constant 0.353553385 : f32
    %9 = vector.broadcast %cst_9 : f32 to vector<8x32xf32>
    %10 = arith.mulf %8, %9 : vector<8x32xf32>
    %c0_10 = arith.constant 0 : index
    %c0_11 = arith.constant 0 : index
    %11 = vector.load %arg5[%c0_10, %c0_11] : memref<32x64xf32, #tpu.memory_space<vmem>>, vector<32x64xf32>
    %cst_12 = arith.constant dense<0.000000e+00> : vector<16x64xf32>
    %12 = tpu.matmul %3, %11, %cst_12 {dimension_numbers = #tpu.dot_dimension_numbers<[1], [0], [0], [1], [0, 0, 1, 1], [], []>} : vector<16x32xf32>, vector<32x64xf32>, vector<16x64xf32> -> vector<16x64xf32>
    %c0_13 = arith.constant 0 : index
    %c0_14 = arith.constant 0 : index
    %13 = vector.load %arg6[%c0_13, %c0_14] : memref<1x64xf32, #tpu.memory_space<vmem>>, vector<1x64xf32>
    %14 = vector.broadcast %13 : vector<1x64xf32> to vector<16x64xf32>
    %15 = arith.addf %12, %14 : vector<16x64xf32>
    %16 = vector.shape_cast %10 : vector<8x32xf32> to vector<1x8x32xf32>
    %17 = vector.extract_strided_slice %15 {offsets = [0, 0], sizes = [16, 32], strides = [1, 1]} : vector<16x64xf32> to vector<16x32xf32>
    %18 = vector.shape_cast %17 : vector<16x32xf32> to vector<1x16x32xf32>
    %19 = vector.extract_strided_slice %15 {offsets = [0, 32], sizes = [16, 32], strides = [1, 1]} : vector<16x64xf32> to vector<16x32xf32>
    %20 = vector.shape_cast %19 : vector<16x32xf32> to vector<1x16x32xf32>
    %21 = vector.extract_strided_slice %16 {offsets = [0, 0, 0], sizes = [1, 8, 8], strides = [1, 1, 1]} : vector<1x8x32xf32> to vector<1x8x8xf32>
    %22 = vector.extract_strided_slice %18 {offsets = [0, 0, 0], sizes = [1, 16, 8], strides = [1, 1, 1]} : vector<1x16x32xf32> to vector<1x16x8xf32>
    %23 = vector.extract_strided_slice %20 {offsets = [0, 0, 0], sizes = [1, 16, 8], strides = [1, 1, 1]} : vector<1x16x32xf32> to vector<1x16x8xf32>
    "tpu.trace_start"() <{level = 10 : i32, message = "bsd,btd->bst"}> : () -> ()
    %cst_15 = arith.constant dense<0.000000e+00> : vector<1x8x16xf32>
    %24 = tpu.matmul %21, %22, %cst_15 {dimension_numbers = #tpu.dot_dimension_numbers<[2], [2], [1], [1], [0, 0, 0, 1, 1, 1], [0], [0]>} : vector<1x8x8xf32>, vector<1x16x8xf32>, vector<1x8x16xf32> -> vector<1x8x16xf32>
    "tpu.trace_stop"() : () -> ()
    %cst_16 = arith.constant dense<0xFF800000> : vector<1x8xf32>
    %25 = vector.multi_reduction <maximumf>, %24, %cst_16 [2] : vector<1x8x16xf32> to vector<1x8xf32>
    %26 = vector.shape_cast %25 : vector<1x8xf32> to vector<1x8x1xf32>
    %27 = vector.broadcast %26 : vector<1x8x1xf32> to vector<1x8x16xf32>
    %28 = arith.subf %24, %27 : vector<1x8x16xf32>
    %29 = math.exp %28 : vector<1x8x16xf32>
    %cst_17 = arith.constant dense<0.000000e+00> : vector<1x8xf32>
    %30 = vector.multi_reduction <add>, %29, %cst_17 [2] : vector<1x8x16xf32> to vector<1x8xf32>
    %31 = vector.shape_cast %30 : vector<1x8xf32> to vector<1x8x1xf32>
    "tpu.trace_start"() <{level = 10 : i32, message = "bst,btd->bsd"}> : () -> ()
    %cst_18 = arith.constant dense<0.000000e+00> : vector<1x8x8xf32>
    %32 = tpu.matmul %29, %23, %cst_18 {dimension_numbers = #tpu.dot_dimension_numbers<[2], [1], [1], [2], [0, 0, 0, 1, 1, 2], [0], [0]>} : vector<1x8x16xf32>, vector<1x16x8xf32>, vector<1x8x8xf32> -> vector<1x8x8xf32>
    "tpu.trace_stop"() : () -> ()
    %33 = tpu.reciprocal %31 {approx = true} : vector<1x8x1xf32> -> vector<1x8x1xf32>
    %34 = vector.broadcast %33 : vector<1x8x1xf32> to vector<1x8x8xf32>
    %35 = arith.mulf %32, %34 : vector<1x8x8xf32>
    %36 = vector.extract_strided_slice %16 {offsets = [0, 0, 8], sizes = [1, 8, 8], strides = [1, 1, 1]} : vector<1x8x32xf32> to vector<1x8x8xf32>
    %37 = vector.extract_strided_slice %18 {offsets = [0, 0, 8], sizes = [1, 16, 8], strides = [1, 1, 1]} : vector<1x16x32xf32> to vector<1x16x8xf32>
    %38 = vector.extract_strided_slice %20 {offsets = [0, 0, 8], sizes = [1, 16, 8], strides = [1, 1, 1]} : vector<1x16x32xf32> to vector<1x16x8xf32>
    "tpu.trace_start"() <{level = 10 : i32, message = "bsd,btd->bst"}> : () -> ()
    %cst_19 = arith.constant dense<0.000000e+00> : vector<1x8x16xf32>
    %39 = tpu.matmul %36, %37, %cst_19 {dimension_numbers = #tpu.dot_dimension_numbers<[2], [2], [1], [1], [0, 0, 0, 1, 1, 1], [0], [0]>} : vector<1x8x8xf32>, vector<1x16x8xf32>, vector<1x8x16xf32> -> vector<1x8x16xf32>
    "tpu.trace_stop"() : () -> ()
    %cst_20 = arith.constant dense<0xFF800000> : vector<1x8xf32>
    %40 = vector.multi_reduction <maximumf>, %39, %cst_20 [2] : vector<1x8x16xf32> to vector<1x8xf32>
    %41 = vector.shape_cast %40 : vector<1x8xf32> to vector<1x8x1xf32>
    %42 = vector.broadcast %41 : vector<1x8x1xf32> to vector<1x8x16xf32>
    %43 = arith.subf %39, %42 : vector<1x8x16xf32>
    %44 = math.exp %43 : vector<1x8x16xf32>
    %cst_21 = arith.constant dense<0.000000e+00> : vector<1x8xf32>
    %45 = vector.multi_reduction <add>, %44, %cst_21 [2] : vector<1x8x16xf32> to vector<1x8xf32>
    %46 = vector.shape_cast %45 : vector<1x8xf32> to vector<1x8x1xf32>
    "tpu.trace_start"() <{level = 10 : i32, message = "bst,btd->bsd"}> : () -> ()
    %cst_22 = arith.constant dense<0.000000e+00> : vector<1x8x8xf32>
    %47 = tpu.matmul %44, %38, %cst_22 {dimension_numbers = #tpu.dot_dimension_numbers<[2], [1], [1], [2], [0, 0, 0, 1, 1, 2], [0], [0]>} : vector<1x8x16xf32>, vector<1x16x8xf32>, vector<1x8x8xf32> -> vector<1x8x8xf32>
    "tpu.trace_stop"() : () -> ()
    %48 = tpu.reciprocal %46 {approx = true} : vector<1x8x1xf32> -> vector<1x8x1xf32>
    %49 = vector.broadcast %48 : vector<1x8x1xf32> to vector<1x8x8xf32>
    %50 = arith.mulf %47, %49 : vector<1x8x8xf32>
    %51 = vector.extract_strided_slice %16 {offsets = [0, 0, 16], sizes = [1, 8, 8], strides = [1, 1, 1]} : vector<1x8x32xf32> to vector<1x8x8xf32>
    %52 = vector.extract_strided_slice %18 {offsets = [0, 0, 16], sizes = [1, 16, 8], strides = [1, 1, 1]} : vector<1x16x32xf32> to vector<1x16x8xf32>
    %53 = vector.extract_strided_slice %20 {offsets = [0, 0, 16], sizes = [1, 16, 8], strides = [1, 1, 1]} : vector<1x16x32xf32> to vector<1x16x8xf32>
    "tpu.trace_start"() <{level = 10 : i32, message = "bsd,btd->bst"}> : () -> ()
    %cst_23 = arith.constant dense<0.000000e+00> : vector<1x8x16xf32>
    %54 = tpu.matmul %51, %52, %cst_23 {dimension_numbers = #tpu.dot_dimension_numbers<[2], [2], [1], [1], [0, 0, 0, 1, 1, 1], [0], [0]>} : vector<1x8x8xf32>, vector<1x16x8xf32>, vector<1x8x16xf32> -> vector<1x8x16xf32>
    "tpu.trace_stop"() : () -> ()
    %cst_24 = arith.constant dense<0xFF800000> : vector<1x8xf32>
    %55 = vector.multi_reduction <maximumf>, %54, %cst_24 [2] : vector<1x8x16xf32> to vector<1x8xf32>
    %56 = vector.shape_cast %55 : vector<1x8xf32> to vector<1x8x1xf32>
    %57 = vector.broadcast %56 : vector<1x8x1xf32> to vector<1x8x16xf32>
    %58 = arith.subf %54, %57 : vector<1x8x16xf32>
    %59 = math.exp %58 : vector<1x8x16xf32>
    %cst_25 = arith.constant dense<0.000000e+00> : vector<1x8xf32>
    %60 = vector.multi_reduction <add>, %59, %cst_25 [2] : vector<1x8x16xf32> to vector<1x8xf32>
    %61 = vector.shape_cast %60 : vector<1x8xf32> to vector<1x8x1xf32>
    "tpu.trace_start"() <{level = 10 : i32, message = "bst,btd->bsd"}> : () -> ()
    %cst_26 = arith.constant dense<0.000000e+00> : vector<1x8x8xf32>
    %62 = tpu.matmul %59, %53, %cst_26 {dimension_numbers = #tpu.dot_dimension_numbers<[2], [1], [1], [2], [0, 0, 0, 1, 1, 2], [0], [0]>} : vector<1x8x16xf32>, vector<1x16x8xf32>, vector<1x8x8xf32> -> vector<1x8x8xf32>
    "tpu.trace_stop"() : () -> ()
    %63 = tpu.reciprocal %61 {approx = true} : vector<1x8x1xf32> -> vector<1x8x1xf32>
    %64 = vector.broadcast %63 : vector<1x8x1xf32> to vector<1x8x8xf32>
    %65 = arith.mulf %62, %64 : vector<1x8x8xf32>
    %66 = vector.extract_strided_slice %16 {offsets = [0, 0, 24], sizes = [1, 8, 8], strides = [1, 1, 1]} : vector<1x8x32xf32> to vector<1x8x8xf32>
    %67 = vector.extract_strided_slice %18 {offsets = [0, 0, 24], sizes = [1, 16, 8], strides = [1, 1, 1]} : vector<1x16x32xf32> to vector<1x16x8xf32>
    %68 = vector.extract_strided_slice %20 {offsets = [0, 0, 24], sizes = [1, 16, 8], strides = [1, 1, 1]} : vector<1x16x32xf32> to vector<1x16x8xf32>
    "tpu.trace_start"() <{level = 10 : i32, message = "bsd,btd->bst"}> : () -> ()
    %cst_27 = arith.constant dense<0.000000e+00> : vector<1x8x16xf32>
    %69 = tpu.matmul %66, %67, %cst_27 {dimension_numbers = #tpu.dot_dimension_numbers<[2], [2], [1], [1], [0, 0, 0, 1, 1, 1], [0], [0]>} : vector<1x8x8xf32>, vector<1x16x8xf32>, vector<1x8x16xf32> -> vector<1x8x16xf32>
    "tpu.trace_stop"() : () -> ()
    %cst_28 = arith.constant dense<0xFF800000> : vector<1x8xf32>
    %70 = vector.multi_reduction <maximumf>, %69, %cst_28 [2] : vector<1x8x16xf32> to vector<1x8xf32>
    %71 = vector.shape_cast %70 : vector<1x8xf32> to vector<1x8x1xf32>
    %72 = vector.broadcast %71 : vector<1x8x1xf32> to vector<1x8x16xf32>
    %73 = arith.subf %69, %72 : vector<1x8x16xf32>
    %74 = math.exp %73 : vector<1x8x16xf32>
    %cst_29 = arith.constant dense<0.000000e+00> : vector<1x8xf32>
    %75 = vector.multi_reduction <add>, %74, %cst_29 [2] : vector<1x8x16xf32> to vector<1x8xf32>
    %76 = vector.shape_cast %75 : vector<1x8xf32> to vector<1x8x1xf32>
    "tpu.trace_start"() <{level = 10 : i32, message = "bst,btd->bsd"}> : () -> ()
    %cst_30 = arith.constant dense<0.000000e+00> : vector<1x8x8xf32>
    %77 = tpu.matmul %74, %68, %cst_30 {dimension_numbers = #tpu.dot_dimension_numbers<[2], [1], [1], [2], [0, 0, 0, 1, 1, 2], [0], [0]>} : vector<1x8x16xf32>, vector<1x16x8xf32>, vector<1x8x8xf32> -> vector<1x8x8xf32>
    "tpu.trace_stop"() : () -> ()
    %78 = tpu.reciprocal %76 {approx = true} : vector<1x8x1xf32> -> vector<1x8x1xf32>
    %79 = vector.broadcast %78 : vector<1x8x1xf32> to vector<1x8x8xf32>
    %80 = arith.mulf %77, %79 : vector<1x8x8xf32>
    %81 = tpu.concatenate %35, %50, %65, %80 in 2 : vector<1x8x8xf32>, vector<1x8x8xf32>, vector<1x8x8xf32>, vector<1x8x8xf32> -> vector<1x8x32xf32>
    %c0_31 = arith.constant 0 : index
    %c0_32 = arith.constant 0 : index
    %c0_33 = arith.constant 0 : index
    %82 = vector.load %arg7[%c0_31, %c0_32, %c0_33] : memref<1x8x32xf32, #tpu.memory_space<vmem>>, vector<1x8x32xf32>
    tpu.vector_store %arg7[%c0_31, %c0_32, %c0_33], %81 {strides = array<i32>} : memref<1x8x32xf32, #tpu.memory_space<vmem>>, vector<1x8x32xf32>,
    return
  }
  func.func @transform_0(%arg0: i32) -> (i32, i32, i32) {
    %c0_i32 = arith.constant 0 : i32
    %c0_i32_0 = arith.constant 0 : i32
    %c0_i32_1 = arith.constant 0 : i32
    return %arg0, %c0_i32, %c0_i32_0 : i32, i32, i32
  }
  func.func @transform_1(%arg0: i32) -> (i32, i32, i32) {
    %c0_i32 = arith.constant 0 : i32
    %c0_i32_0 = arith.constant 0 : i32
    %c0_i32_1 = arith.constant 0 : i32
    return %arg0, %c0_i32, %c0_i32_0 : i32, i32, i32
  }
  func.func @transform_2(%arg0: i32) -> (i32, i32) {
    %c0_i32 = arith.constant 0 : i32
    %c0_i32_0 = arith.constant 0 : i32
    %c0_i32_1 = arith.constant 0 : i32
    return %c0_i32, %c0_i32_0 : i32, i32
  }
  func.func @transform_3(%arg0: i32) -> (i32, i32) {
    %c0_i32 = arith.constant 0 : i32
    %c0_i32_0 = arith.constant 0 : i32
    %c0_i32_1 = arith.constant 0 : i32
    return %c0_i32, %c0_i32_0 : i32, i32
  }
  func.func @transform_4(%arg0: i32) -> (i32, i32) {
    %c0_i32 = arith.constant 0 : i32
    %c0_i32_0 = arith.constant 0 : i32
    %c0_i32_1 = arith.constant 0 : i32
    return %c0_i32, %c0_i32_0 : i32, i32
  }
  func.func @transform_5(%arg0: i32) -> (i32, i32) {
    %c0_i32 = arith.constant 0 : i32
    %c0_i32_0 = arith.constant 0 : i32
    %c0_i32_1 = arith.constant 0 : i32
    return %c0_i32, %c0_i32_0 : i32, i32
  }
  func.func @transform_6(%arg0: i32) -> (i32, i32, i32) {
    %c0_i32 = arith.constant 0 : i32
    %c0_i32_0 = arith.constant 0 : i32
    %c0_i32_1 = arith.constant 0 : i32
    return %arg0, %c0_i32, %c0_i32_0 : i32, i32, i32
  }
}

</mosaic_0001>

<llo_original>
// kernel: tpu_custom_call.1
$region0: #{tpu_custom_call.1}
  #allocation0 [shape = 'u32[]', space=smem, size = 0x4, offset = 0x4, fixed_abs, tag = 'smem constant byte address 0x4 - core index']
  #allocation1 [shape = 'u32[144,128]{1,0:T(1,128)}', space=vmem, size = 0x12000, scoped, tag = 'internal scratch']
  %s0 = inlined_call_operand.hbm [shape: f32[2,8,32], index: 0, kind: input, shape index: {}]
  %s1 = inlined_call_operand.hbm [shape: f32[2,16,32], index: 1, kind: input, shape index: {}]
  %s2 = inlined_call_operand.hbm [shape: f32[32,32], index: 2, kind: input, shape index: {}]
  %s3 = inlined_call_operand.vmem [shape: f32[1,32], index: 3, kind: input, shape index: {}]
  %s4 = inlined_call_operand.hbm [shape: f32[32,64], index: 4, kind: input, shape index: {}]
  %s5 = inlined_call_operand.vmem [shape: f32[1,64], index: 5, kind: input, shape index: {}]
  %s6 = inlined_call_operand.hbm [shape: f32[2,8,32], index: 6, kind: output, shape index: {}]
  %s7 = sld [smem:[#allocation0]]
  $region73: #{tpu_custom_call.1} parent=0
    _
  %s9 = ssub.s32 1, %s7
  %s10 = scalar_select 0, %s9, %s7
  $region1: #{tpu_custom_call.1} parent=0
    #allocation2 [shape = 'u8[8192]{0}', space=vmem, size = 0x2000, scoped, tag = 'input window, operand 0']
    #allocation3 [shape = 's32[2]{0}', space=sflag, size = 0x8, scoped, tag = 'scoped memory for tpu_custom_call.1']
    #allocation4 [shape = 's32[2]{0}', space=sflag, size = 0x8, scoped, tag = 'scoped memory for tpu_custom_call.1']
    #allocation5 [shape = 'u8[16384]{0}', space=vmem, size = 0x4000, scoped, tag = 'input window, operand 1']
    #allocation6 [shape = 's32[2]{0}', space=sflag, size = 0x8, scoped, tag = 'scoped memory for tpu_custom_call.1']
    #allocation7 [shape = 'u8[16384]{0}', space=vmem, size = 0x4000, scoped, tag = 'input window, operand 2, single buffered']
    #allocation8 [shape = 'u8[16384]{0}', space=vmem, size = 0x4000, scoped, tag = 'input window, operand 4, single buffered']
    #allocation9 [shape = 's32[1]{0}', space=sflag, size = 0x4, scoped, tag = 'scoped memory for tpu_custom_call.1']
    #allocation10 [shape = 'u8[8192]{0}', space=vmem, size = 0x2000, scoped, tag = 'output window, operand 0']
    %11 = vsyncpa [#allocation3], 0
    %s12 = scalar_lea.sflag [#allocation3], 1
    %13 = vsyncpa %s12, 0
    %14 = vsyncpa [#allocation6], 0
    %s15 = scalar_lea.sflag [#allocation6], 1
    %16 = vsyncpa %s15, 0
    %17 = vsyncpa [#allocation9], 0
    %18 = vsyncpa [#allocation4], 0
    %s19 = scalar_lea.sflag [#allocation4], 1
    %20 = vsyncpa %s19, 0
    loop: start=0, step=1, limit=4
    $region2: #{tpu_custom_call.1} parent=1 // loop_pre_header
      _
    $region3: #{tpu_custom_call.1} parent=1 // loop_header
      %s22 = sphi 0, %s26
      %p23 = scmp.ge.s32.totalorder %s22, 4
      %s32 = sphi 0, %s34
      %s35 = sphi 0, %s32
      %s36 = sphi 0, %s35
      %s52 = sphi 0, %s36
      %s58 = sphi 0, %s60
      %s61 = sphi 0, %s58
      %s62 = sphi 0, %s61
      %s78 = sphi 0, %s62
      %s82 = sphi 0, %s82
      %s84 = sphi 0, %s82
      %s85 = sphi 0, %s84
      %s99 = sphi 0, %s85
      %s103 = sphi 0, %s103
      %s105 = sphi 0, %s103
      %s106 = sphi 0, %s105
      %s120 = sphi 0, %s106
      %s124 = sphi 0, %s124
      %s126 = sphi 0, %s124
      %s127 = sphi 0, %s126
      %s141 = sphi 0, %s127
      %s145 = sphi 0, %s145
      %s147 = sphi 0, %s145
      %s148 = sphi 0, %s147
      %s162 = sphi 0, %s148
      %s168 = sphi 0, %s170
      %s171 = sphi 0, %s168
      %s172 = sphi 0, %s171
      %s188 = sphi 0, %s172
    $region4: #{tpu_custom_call.1} parent=1 // loop_header_branch
      %25 = sbr.rel (%p23) target = $region8
    $region5: #{tpu_custom_call.1} parent=1 // loop_body
      %s27 = ssub.s32 %s22, 1
      %s28 = ssub.s32 %s22, 2
      %s29 = sadd.s32 %s22, 1
      %s30 = ssub.s32 %s22, %s29
      %p31 = scmp.eq.s32.totalorder %s30, 0
      %s33 = sadd.s32 %s32, 1
      %s34 = scalar_select %p31, %s32, %s33
      %p37 = pneg %p31
      %p38 = scmp.eq.s32.totalorder %s22, 1
      %p39 = por %p37, %p38
      %p40 = scmp.ne.s32.totalorder %s32, %s35
      %p41 = scmp.eq.s32.totalorder %s22, 0
      %p42 = por %p40, %p41
      %p43 = scmp.ne.s32.totalorder %s32, %s35
      %p44 = scmp.eq.s32.totalorder %s27, 1
      %p45 = por %p43, %p44
      %p46 = scmp.ne.s32.totalorder %s35, %s36
      %p47 = scmp.eq.s32.totalorder %s27, 0
      %p48 = por %p46, %p47
      %p49 = scmp.ne.s32.totalorder %s35, %s36
      %p50 = scmp.eq.s32.totalorder %s28, 1
      %p51 = por %p49, %p50
      %p53 = scmp.ne.s32.totalorder %s36, %s52
      %p54 = scmp.eq.s32.totalorder %s28, 0
      %p55 = por %p53, %p54
      %s56 = ssub.s32 %s22, %s29
      %p57 = scmp.eq.s32.totalorder %s56, 0
      %s59 = sadd.s32 %s58, 1
      %s60 = scalar_select %p57, %s58, %s59
      %p63 = pneg %p57
      %p64 = scmp.eq.s32.totalorder %s22, 1
      %p65 = por %p63, %p64
      %p66 = scmp.ne.s32.totalorder %s58, %s61
      %p67 = scmp.eq.s32.totalorder %s22, 0
      %p68 = por %p66, %p67
      %p69 = scmp.ne.s32.totalorder %s58, %s61
      %p70 = scmp.eq.s32.totalorder %s27, 1
      %p71 = por %p69, %p70
      %p72 = scmp.ne.s32.totalorder %s61, %s62
      %p73 = scmp.eq.s32.totalorder %s27, 0
      %p74 = por %p72, %p73
      %p75 = scmp.ne.s32.totalorder %s61, %s62
      %p76 = scmp.eq.s32.totalorder %s28, 1
      %p77 = por %p75, %p76
      %p79 = scmp.ne.s32.totalorder %s62, %s78
      %p80 = scmp.eq.s32.totalorder %s28, 0
      %p81 = por %p79, %p80
      %s83 = sadd.s32 %s82, 1
      %p86 = scmp.eq.s32.totalorder %s22, 1
      %p87 = scmp.ne.s32.totalorder %s82, %s84
      %p88 = scmp.eq.s32.totalorder %s22, 0
      %p89 = por %p87, %p88
      %p90 = scmp.ne.s32.totalorder %s82, %s84
      %p91 = scmp.eq.s32.totalorder %s27, 1
      %p92 = por %p90, %p91
      %p93 = scmp.ne.s32.totalorder %s84, %s85
      %p94 = scmp.eq.s32.totalorder %s27, 0
      %p95 = por %p93, %p94
      %p96 = scmp.ne.s32.totalorder %s84, %s85
      %p97 = scmp.eq.s32.totalorder %s28, 1
      %p98 = por %p96, %p97
      %p100 = scmp.ne.s32.totalorder %s85, %s99
      %p101 = scmp.eq.s32.totalorder %s28, 0
      %p102 = por %p100, %p101
      %s104 = sadd.s32 %s103, 1
      %p107 = scmp.eq.s32.totalorder %s22, 1
      %p108 = scmp.ne.s32.totalorder %s103, %s105
      %p109 = scmp.eq.s32.totalorder %s22, 0
      %p110 = por %p108, %p109
      %p111 = scmp.ne.s32.totalorder %s103, %s105
      %p112 = scmp.eq.s32.totalorder %s27, 1
      %p113 = por %p111, %p112
      %p114 = scmp.ne.s32.totalorder %s105, %s106
      %p115 = scmp.eq.s32.totalorder %s27, 0
      %p116 = por %p114, %p115
      %p117 = scmp.ne.s32.totalorder %s105, %s106
      %p118 = scmp.eq.s32.totalorder %s28, 1
      %p119 = por %p117, %p118
      %p121 = scmp.ne.s32.totalorder %s106, %s120
      %p122 = scmp.eq.s32.totalorder %s28, 0
      %p123 = por %p121, %p122
      %s125 = sadd.s32 %s124, 1
      %p128 = scmp.eq.s32.totalorder %s22, 1
      %p129 = scmp.ne.s32.totalorder %s124, %s126
      %p130 = scmp.eq.s32.totalorder %s22, 0
      %p131 = por %p129, %p130
      %p132 = scmp.ne.s32.totalorder %s124, %s126
      %p133 = scmp.eq.s32.totalorder %s27, 1
      %p134 = por %p132, %p133
      %p135 = scmp.ne.s32.totalorder %s126, %s127
      %p136 = scmp.eq.s32.totalorder %s27, 0
      %p137 = por %p135, %p136
      %p138 = scmp.ne.s32.totalorder %s126, %s127
      %p139 = scmp.eq.s32.totalorder %s28, 1
      %p140 = por %p138, %p139
      %p142 = scmp.ne.s32.totalorder %s127, %s141
      %p143 = scmp.eq.s32.totalorder %s28, 0
      %p144 = por %p142, %p143
      %s146 = sadd.s32 %s145, 1
      %p149 = scmp.eq.s32.totalorder %s22, 1
      %p150 = scmp.ne.s32.totalorder %s145, %s147
      %p151 = scmp.eq.s32.totalorder %s22, 0
      %p152 = por %p150, %p151
      %p153 = scmp.ne.s32.totalorder %s145, %s147
      %p154 = scmp.eq.s32.totalorder %s27, 1
      %p155 = por %p153, %p154
      %p156 = scmp.ne.s32.totalorder %s147, %s148
      %p157 = scmp.eq.s32.totalorder %s27, 0
      %p158 = por %p156, %p157
      %p159 = scmp.ne.s32.totalorder %s147, %s148
      %p160 = scmp.eq.s32.totalorder %s28, 1
      %p161 = por %p159, %p160
      %p163 = scmp.ne.s32.totalorder %s148, %s162
      %p164 = scmp.eq.s32.totalorder %s28, 0
      %p165 = por %p163, %p164
      %s166 = ssub.s32 %s22, %s29
      %p167 = scmp.eq.s32.totalorder %s166, 0
      %s169 = sadd.s32 %s168, 1
      %s170 = scalar_select %p167, %s168, %s169
      %p173 = pneg %p167
      %p174 = scmp.eq.s32.totalorder %s22, 1
      %p175 = por %p173, %p174
      %p176 = scmp.ne.s32.totalorder %s168, %s171
      %p177 = scmp.eq.s32.totalorder %s22, 0
      %p178 = por %p176, %p177
      %p179 = scmp.ne.s32.totalorder %s168, %s171
      %p180 = scmp.eq.s32.totalorder %s27, 1
      %p181 = por %p179, %p180
      %p182 = scmp.ne.s32.totalorder %s171, %s172
      %p183 = scmp.eq.s32.totalorder %s27, 0
      %p184 = por %p182, %p183
      %p185 = scmp.ne.s32.totalorder %s171, %s172
      %p186 = scmp.eq.s32.totalorder %s28, 1
      %p187 = por %p185, %p186
      %p189 = scmp.ne.s32.totalorder %s172, %s188
      %p190 = scmp.eq.s32.totalorder %s28, 0
      %p191 = por %p189, %p190
      %p192 = scmp.le.s32.totalorder 1, %s22
      %p193 = scmp.lt.s32.totalorder %s22, 3
      %p194 = pnand %p192, %p193
      %p195 = pneg %p194
      // Predicated region
      $region9: #{tpu_custom_call.1} parent=5 // pred_check
        _
      $region10: #{tpu_custom_call.1} parent=5 // pred_check_branch
        %197 = sbr.rel (%p194) target = $region12
      $region11: #{tpu_custom_call.1} parent=5 // pred_region
        %s198 = ssub.s32 %s22, 1
        // Predicated region
        $region13: #{tpu_custom_call.1} parent=11 // pred_check
          %p199 = pneg %p95
        $region14: #{tpu_custom_call.1} parent=11 // pred_check_branch
          %201 = sbr.rel (%p199) target = $region16
        $region15: #{tpu_custom_call.1} parent=11 // pred_region
          %s203 = ssub.s32 512, 512
          %204 = vsyncadd [#allocation6], %s203
          %s205 = sshll.u32 [#allocation7], 4
          %s206 = int_to_ptr.vmem [resolvable:$true] %s205
          %211 = dma.hbm_to_vmem [thread:$0]  %s2, 512, %s206, [#allocation6], 128, 128, 8
        $region16: #{tpu_custom_call.1} parent=11 // pred_fallthru
          _
        // Predicated region
        $region17: #{tpu_custom_call.1} parent=11 // pred_check
          %p212 = pneg %p116
        $region18: #{tpu_custom_call.1} parent=11 // pred_check_branch
          %214 = sbr.rel (%p212) target = $region20
        $region19: #{tpu_custom_call.1} parent=11 // pred_region
          _
        $region20: #{tpu_custom_call.1} parent=11 // pred_fallthru
          _
        // Predicated region
        $region21: #{tpu_custom_call.1} parent=11 // pred_check
          %p215 = pneg %p137
        $region22: #{tpu_custom_call.1} parent=11 // pred_check_branch
          %217 = sbr.rel (%p215) target = $region24
        $region23: #{tpu_custom_call.1} parent=11 // pred_region
          %s219 = ssub.s32 512, 512
          %220 = vsyncadd [#allocation9], %s219
          %s221 = sshll.u32 [#allocation8], 4
          %s222 = int_to_ptr.vmem [resolvable:$true] %s221
          %227 = dma.hbm_to_vmem [thread:$0]  %s4, 512, %s222, [#allocation9], 128, 128, 8
        $region24: #{tpu_custom_call.1} parent=11 // pred_fallthru
          _
        // Predicated region
        $region25: #{tpu_custom_call.1} parent=11 // pred_check
          %p228 = pneg %p158
        $region26: #{tpu_custom_call.1} parent=11 // pred_check_branch
          %230 = sbr.rel (%p228) target = $region28
        $region27: #{tpu_custom_call.1} parent=11 // pred_region
          _
        $region28: #{tpu_custom_call.1} parent=11 // pred_fallthru
          _
      $region12: #{tpu_custom_call.1} parent=5 // pred_fallthru
        _
      %p231 = scmp.lt.s32.totalorder %s22, 2
      // Predicated region
      $region29: #{tpu_custom_call.1} parent=5 // pred_check
        %p232 = pneg %p231
      $region30: #{tpu_custom_call.1} parent=5 // pred_check_branch
        %234 = sbr.rel (%p232) target = $region32
      $region31: #{tpu_custom_call.1} parent=5 // pred_region
        // Predicated region
        $region33: #{tpu_custom_call.1} parent=31 // pred_check
          %p235 = pneg %p42
        $region34: #{tpu_custom_call.1} parent=31 // pred_check_branch
          %237 = sbr.rel (%p235) target = $region36
        $region35: #{tpu_custom_call.1} parent=31 // pred_region
          %s238 = sand.u32 %s32, 1
          %s239 = scalar_lea.sflag [#allocation3], %s238
          %s240 = sand.u32 %s32, 1
          %s241 = smul.addr %s240, 8
          %s242 = scalar_lea.vmem [#allocation2], %s241
          %s244 = ssub.s32 128, 128
          %245 = vsyncadd %s239, %s244
          %s246 = smul.addr %s22, 128
          %s247 = scalar_lea.hbm %s0, %s246
          %s249 = sshll.u32 %s242, 4
          %s250 = int_to_ptr.vmem [resolvable:$true] %s249
          %252 = dma.hbm_to_vmem [thread:$0]  %s247, 128, %s250, %s239
        $region36: #{tpu_custom_call.1} parent=31 // pred_fallthru
          _
        // Predicated region
        $region37: #{tpu_custom_call.1} parent=31 // pred_check
          %p253 = pneg %p68
        $region38: #{tpu_custom_call.1} parent=31 // pred_check_branch
          %255 = sbr.rel (%p253) target = $region40
        $region39: #{tpu_custom_call.1} parent=31 // pred_region
          %s256 = sand.u32 %s22, 1
          %s257 = scalar_lea.sflag [#allocation6], %s256
          %s258 = sand.u32 %s58, 1
          %s259 = smul.addr %s258, 16
          %s260 = scalar_lea.vmem [#allocation5], %s259
          %s262 = ssub.s32 256, 256
          %263 = vsyncadd %s257, %s262
          %s264 = smul.addr %s22, 2
          %s265 = smul.addr %s264, 128
          %s266 = scalar_lea.hbm %s1, %s265
          %s267 = sshll.u32 %s260, 4
          %s268 = int_to_ptr.vmem [resolvable:$true] %s267
          %273 = dma.hbm_to_vmem [thread:$0]  %s266, 256, %s268, %s257, 128, 128, 8
        $region40: #{tpu_custom_call.1} parent=31 // pred_fallthru
          _
      $region32: #{tpu_custom_call.1} parent=5 // pred_fallthru
        _
      %p274 = scmp.le.s32.totalorder 1, %s22
      %p275 = scmp.lt.s32.totalorder %s22, 3
      %p276 = pnand %p274, %p275
      %p277 = pneg %p276
      // Predicated region
      $region41: #{tpu_custom_call.1} parent=5 // pred_check
        _
      $region42: #{tpu_custom_call.1} parent=5 // pred_check_branch
        %279 = sbr.rel (%p276) target = $region44
      $region43: #{tpu_custom_call.1} parent=5 // pred_region
        %s280 = ssub.s32 %s22, 1
        %s281 = sand.u32 %s35, 1
        %s282 = scalar_lea.sflag [#allocation3], %s281
        %s283 = sand.u32 %s35, 1
        %s284 = smul.addr %s283, 8
        %s285 = scalar_lea.vmem [#allocation2], %s284
        // Predicated region
        $region45: #{tpu_custom_call.1} parent=43 // pred_check
          %p286 = pneg %p48
        $region46: #{tpu_custom_call.1} parent=43 // pred_check_branch
          %288 = sbr.rel (%p286) target = $region48
        $region47: #{tpu_custom_call.1} parent=43 // pred_region
          %289 = dma.done %s282, 128
        $region48: #{tpu_custom_call.1} parent=43 // pred_fallthru
          _
        %s290 = sand.u32 %s27, 1
        %s291 = scalar_lea.sflag [#allocation6], %s290
        %s292 = sand.u32 %s61, 1
        %s293 = smul.addr %s292, 16
        %s294 = scalar_lea.vmem [#allocation5], %s293
        // Predicated region
        $region49: #{tpu_custom_call.1} parent=43 // pred_check
          %p295 = pneg %p74
        $region50: #{tpu_custom_call.1} parent=43 // pred_check_branch
          %297 = sbr.rel (%p295) target = $region52
        $region51: #{tpu_custom_call.1} parent=43 // pred_region
          %298 = dma.done %s291, 256
        $region52: #{tpu_custom_call.1} parent=43 // pred_fallthru
          _
        // Predicated region
        $region53: #{tpu_custom_call.1} parent=43 // pred_check
          %p299 = pneg %p95
        $region54: #{tpu_custom_call.1} parent=43 // pred_check_branch
          %301 = sbr.rel (%p299) target = $region56
        $region55: #{tpu_custom_call.1} parent=43 // pred_region
          %302 = dma.done [#allocation6], 512
        $region56: #{tpu_custom_call.1} parent=43 // pred_fallthru
          _
        // Predicated region
        $region57: #{tpu_custom_call.1} parent=43 // pred_check
          %p303 = pneg %p137
        $region58: #{tpu_custom_call.1} parent=43 // pred_check_branch
          %305 = sbr.rel (%p303) target = $region60
        $region59: #{tpu_custom_call.1} parent=43 // pred_region
          %306 = dma.done [#allocation9], 512
        $region60: #{tpu_custom_call.1} parent=43 // pred_fallthru
          _
        %s307 = sand.u32 %s35, 1
        %s308 = scalar_lea.sflag [#allocation3], %s307
        %s309 = sand.u32 %s35, 1
        %s310 = smul.addr %s309, 8
        %s311 = scalar_lea.vmem [#allocation2], %s310
        %p312 = pneg %p48
        %p313 = pneg %p45
        %s314 = sand.u32 %s27, 1
        %s315 = scalar_lea.sflag [#allocation6], %s314
        %s316 = sand.u32 %s61, 1
        %s317 = smul.addr %s316, 16
        %s318 = scalar_lea.vmem [#allocation5], %s317
        %p319 = pneg %p74
        %p320 = pneg %p71
        %p321 = pneg %p95
        %p322 = pneg %p92
        %p323 = pneg %p116
        %p324 = pneg %p113
        %p325 = pneg %p137
        %p326 = pneg %p134
        %p327 = pneg %p158
        %p328 = pneg %p155
        %p329 = pneg %p184
        %p330 = pneg %p181
        %s331 = sand.u32 %s171, 1
        %s332 = scalar_lea.sflag [#allocation4], %s331
        %s333 = sand.u32 %s171, 1
        %s334 = smul.addr %s333, 8
        %s335 = scalar_lea.vmem [#allocation10], %s334
        %v336 = vld [vmem:[%s285] sm:$0xff]
        %v337 = vld [vmem:[%s294] sm:$0xff]
        %v338 = vld [vmem:[%s294 + $0x8] sm:$0xff]
        %v339 = vld [vmem:[#allocation7] sm:$0xff]
        %v340 = vld [vmem:[#allocation7 + $0x8] sm:$0xff]
        %v341 = vld [vmem:[#allocation7 + $0x10] sm:$0xff]
        %v342 = vld [vmem:[#allocation7 + $0x18] sm:$0xff]
        %v343 = vld [vmem:[%s3] sm:$0x1]
        %v345 = vlaneseq
        %v346 = vshrl.u32 %v345, 7
        %v347 = vsub.s32 0, %v346
        %v348 = vrot.slane %v343, %v347
        %vm350 = vcmask 261120
        %v352 = vsel %vm350, %v336, 0
        %354 = vmatprep.subr.mxu0 0.0
        %355 = vmatpush1.msra.mxu0 %v339
        %356 = vmatprep.subr.mxu0 0.0
        %357 = vmatpush1.msra.mxu0 %v340
        %358 = vmatprep.subr.mxu0 0.0
        %359 = vmatpush1.msra.mxu0 %v341
        %360 = vmatprep.subr.mxu0 0.0
        %361 = vmatpush1.msra.mxu0 %v342
        %362 = vmatprep.subr.mxu0 0.0
        %363 = vmatpush1.msra.mxu0 0.0
        %364 = vmatprep.subr.mxu0 0.0
        %365 = vmatpush1.msra.mxu0 0.0
        %366 = vmatprep.subr.mxu0 0.0
        %367 = vmatpush1.msra.mxu0 0.0
        %368 = vmatprep.subr.mxu0 0.0
        %369 = vmatpush1.msra.mxu0 0.0
        %370 = vmatprep.subr.mxu0 0.0
        %371 = vmatpush1.msra.mxu0 0.0
        %372 = vmatprep.subr.mxu0 0.0
        %373 = vmatpush1.msra.mxu0 0.0
        %374 = vmatprep.subr.mxu0 0.0
        %375 = vmatpush1.msra.mxu0 0.0
        %376 = vmatprep.subr.mxu0 0.0
        %377 = vmatpush1.msra.mxu0 0.0
        %378 = vmatprep.subr.mxu0 0.0
        %379 = vmatpush1.msra.mxu0 0.0
        %380 = vmatprep.subr.mxu0 0.0
        %381 = vmatpush1.msra.mxu0 0.0
        %382 = vmatprep.subr.mxu0 0.0
        %383 = vmatpush1.msra.mxu0 0.0
        %384 = vmatprep.subr.mxu0 0.0
        %385 = vmatpush1.msra.mxu0 0.0
        %386 = vmatprep.subr.mxu0 0.0
        %387 = vmatpush1.msra.mxu0 0.0
        %388 = vmatprep.subr.mxu0 0.0
        %389 = vmatpush1.msra.mxu0 0.0
        %390 = vmatprep.subr.mxu0 0.0
        %391 = vmatpush1.msra.mxu0 0.0
        %392 = vmatprep.subr.mxu0 0.0
        %393 = vmatpush1.msra.mxu0 0.0
        %394 = vmatprep.subr.mxu0 0.0
        %395 = vmatpush1.msra.mxu0 0.0
        %396 = vmatprep.subr.mxu0 0.0
        %397 = vmatpush1.msra.mxu0 0.0
        %398 = vmatprep.subr.mxu0 0.0
        %399 = vmatpush1.msra.mxu0 0.0
        %400 = vmatprep.subr.mxu0 0.0
        %401 = vmatpush1.msra.mxu0 0.0
        %402 = vmatprep.subr.mxu0 0.0
        %403 = vmatpush1.msra.mxu0 0.0
        %404 = vmatprep.subr.mxu0 0.0
        %405 = vmatpush1.msra.mxu0 0.0
        %406 = vmatprep.subr.mxu0 0.0
        %407 = vmatpush1.msra.mxu0 0.0
        %408 = vmatprep.subr.mxu0 0.0
        %409 = vmatpush1.msra.mxu0 0.0
        %410 = vmatprep.subr.mxu0 0.0
        %411 = vmatpush1.msra.mxu0 0.0
        %412 = vmatprep.subr.mxu0 0.0
        %413 = vmatpush1.msra.mxu0 0.0
        %414 = vmatprep.subr.mxu0 0.0
        %415 = vmatpush1.msra.mxu0 0.0
        %416 = vmatprep.subr.mxu0 0.0
        %417 = vmatpush1.msra.mxu0 0.0
        %418 = vmatprep.mubr.f32.mxu0 0.0
        %419 = vmatmul.mubr.f32.gmra.mrb[0].mxu0 %v352
        %v420 = vpop.f32.mrb[0].mxu0
        %v421 = vadd.f32 %v348, %v420
        %v422 = vpop.f32.mrb[0].mxu0
        %423 = vdwg.mxu0
        %v424 = vmul.f32 %v421, 0.35355338
        %v425 = vld [vmem:[#allocation8] sm:$0xff]
        %v426 = vld [vmem:[#allocation8 + $0x8] sm:$0xff]
        %v427 = vld [vmem:[#allocation8 + $0x10] sm:$0xff]
        %v428 = vld [vmem:[#allocation8 + $0x18] sm:$0xff]
        %v429 = vld [vmem:[%s5] sm:$0x1]
        %v431 = vlaneseq
        %v432 = vshrl.u32 %v431, 7
        %v433 = vsub.s32 0, %v432
        %v434 = vrot.slane %v429, %v433
        %v437 = vsel %vm350, %v337, 0
        %v440 = vsel %vm350, %v338, 0
        %442 = vmatprep.subr.mxu0 0.0
        %443 = vmatpush1.msra.mxu0 %v425
        %444 = vmatprep.subr.mxu0 0.0
        %445 = vmatpush1.msra.mxu0 %v426
        %446 = vmatprep.subr.mxu0 0.0
        %447 = vmatpush1.msra.mxu0 %v427
        %448 = vmatprep.subr.mxu0 0.0
        %449 = vmatpush1.msra.mxu0 %v428
        %450 = vmatprep.subr.mxu0 0.0
        %451 = vmatpush1.msra.mxu0 0.0
        %452 = vmatprep.subr.mxu0 0.0
        %453 = vmatpush1.msra.mxu0 0.0
        %454 = vmatprep.subr.mxu0 0.0
        %455 = vmatpush1.msra.mxu0 0.0
        %456 = vmatprep.subr.mxu0 0.0
        %457 = vmatpush1.msra.mxu0 0.0
        %458 = vmatprep.subr.mxu0 0.0
        %459 = vmatpush1.msra.mxu0 0.0
        %460 = vmatprep.subr.mxu0 0.0
        %461 = vmatpush1.msra.mxu0 0.0
        %462 = vmatprep.subr.mxu0 0.0
        %463 = vmatpush1.msra.mxu0 0.0
        %464 = vmatprep.subr.mxu0 0.0
        %465 = vmatpush1.msra.mxu0 0.0
        %466 = vmatprep.subr.mxu0 0.0
        %467 = vmatpush1.msra.mxu0 0.0
        %468 = vmatprep.subr.mxu0 0.0
        %469 = vmatpush1.msra.mxu0 0.0
        %470 = vmatprep.subr.mxu0 0.0
        %471 = vmatpush1.msra.mxu0 0.0
        %472 = vmatprep.subr.mxu0 0.0
        %473 = vmatpush1.msra.mxu0 0.0
        %474 = vmatprep.subr.mxu0 0.0
        %475 = vmatpush1.msra.mxu0 0.0
        %476 = vmatprep.subr.mxu0 0.0
        %477 = vmatpush1.msra.mxu0 0.0
        %478 = vmatprep.subr.mxu0 0.0
        %479 = vmatpush1.msra.mxu0 0.0
        %480 = vmatprep.subr.mxu0 0.0
        %481 = vmatpush1.msra.mxu0 0.0
        %482 = vmatprep.subr.mxu0 0.0
        %483 = vmatpush1.msra.mxu0 0.0
        %484 = vmatprep.subr.mxu0 0.0
        %485 = vmatpush1.msra.mxu0 0.0
        %486 = vmatprep.subr.mxu0 0.0
        %487 = vmatpush1.msra.mxu0 0.0
        %488 = vmatprep.subr.mxu0 0.0
        %489 = vmatpush1.msra.mxu0 0.0
        %490 = vmatprep.subr.mxu0 0.0
        %491 = vmatpush1.msra.mxu0 0.0
        %492 = vmatprep.subr.mxu0 0.0
        %493 = vmatpush1.msra.mxu0 0.0
        %494 = vmatprep.subr.mxu0 0.0
        %495 = vmatpush1.msra.mxu0 0.0
        %496 = vmatprep.subr.mxu0 0.0
        %497 = vmatpush1.msra.mxu0 0.0
        %498 = vmatprep.subr.mxu0 0.0
        %499 = vmatpush1.msra.mxu0 0.0
        %500 = vmatprep.subr.mxu0 0.0
        %501 = vmatpush1.msra.mxu0 0.0
        %502 = vmatprep.subr.mxu0 0.0
        %503 = vmatpush1.msra.mxu0 0.0
        %504 = vmatprep.subr.mxu0 0.0
        %505 = vmatpush1.msra.mxu0 0.0
        %506 = vmatprep.mubr.f32.mxu0 0.0
        %507 = vmatmul.mubr.f32.gmra.mrb[0].mxu0 %v437
        %v508 = vpop.f32.mrb[0].mxu0
        %v509 = vadd.f32 %v434, %v508
        %v510 = vpop.f32.mrb[0].mxu0
        %511 = vmatprep.mubr.f32.mxu0 0.0
        %512 = vmatmul.mubr.f32.gmra.mrb[0].mxu0 %v440
        %v513 = vpop.f32.mrb[0].mxu0
        %v514 = vadd.f32 %v434, %v513
        %v515 = vpop.f32.mrb[0].mxu0
        %516 = vdwg.mxu0
        %vm517 = vcmask 64512
        %v519 = vsel %vm517, %v424, 0
        %v522 = vsel %vm517, %v509, 0
        %v525 = vsel %vm517, %v514, 0
        %527 = vmatprep.subr.mxu0 0.0
        %528 = vmatpush1.xpose.msra.mxu0 %v522
        %529 = vmatprep.subr.mxu0 0.0
        %530 = vmatpush1.xpose.msra.mxu0 %v525
        %531 = vmatprep.subr.mxu0 0.0
        %532 = vmatpush1.xpose.msra.mxu0 0.0
        %533 = vmatprep.subr.mxu0 0.0
        %534 = vmatpush1.xpose.msra.mxu0 0.0
        %535 = vmatprep.subr.mxu0 0.0
        %536 = vmatpush1.xpose.msra.mxu0 0.0
        %537 = vmatprep.subr.mxu0 0.0
        %538 = vmatpush1.xpose.msra.mxu0 0.0
        %539 = vmatprep.subr.mxu0 0.0
        %540 = vmatpush1.xpose.msra.mxu0 0.0
        %541 = vmatprep.subr.mxu0 0.0
        %542 = vmatpush1.xpose.msra.mxu0 0.0
        %543 = vmatprep.subr.mxu0 0.0
        %544 = vmatpush1.xpose.msra.mxu0 0.0
        %545 = vmatprep.subr.mxu0 0.0
        %546 = vmatpush1.xpose.msra.mxu0 0.0
        %547 = vmatprep.subr.mxu0 0.0
        %548 = vmatpush1.xpose.msra.mxu0 0.0
        %549 = vmatprep.subr.mxu0 0.0
        %550 = vmatpush1.xpose.msra.mxu0 0.0
        %551 = vmatprep.subr.mxu0 0.0
        %552 = vmatpush1.xpose.msra.mxu0 0.0
        %553 = vmatprep.subr.mxu0 0.0
        %554 = vmatpush1.xpose.msra.mxu0 0.0
        %555 = vmatprep.subr.mxu0 0.0
        %556 = vmatpush1.xpose.msra.mxu0 0.0
        %557 = vmatprep.subr.mxu0 0.0
        %558 = vmatpush1.xpose.msra.mxu0 0.0
        %559 = vmatprep.subr.mxu0 0.0
        %560 = vmatpush1.xpose.msra.mxu0 0.0
        %561 = vmatprep.subr.mxu0 0.0
        %562 = vmatpush1.xpose.msra.mxu0 0.0
        %563 = vmatprep.subr.mxu0 0.0
        %564 = vmatpush1.xpose.msra.mxu0 0.0
        %565 = vmatprep.subr.mxu0 0.0
        %566 = vmatpush1.xpose.msra.mxu0 0.0
        %567 = vmatprep.subr.mxu0 0.0
        %568 = vmatpush1.xpose.msra.mxu0 0.0
        %569 = vmatprep.subr.mxu0 0.0
        %570 = vmatpush1.xpose.msra.mxu0 0.0
        %571 = vmatprep.subr.mxu0 0.0
        %572 = vmatpush1.xpose.msra.mxu0 0.0
        %573 = vmatprep.subr.mxu0 0.0
        %574 = vmatpush1.xpose.msra.mxu0 0.0
        %575 = vmatprep.subr.mxu0 0.0
        %576 = vmatpush1.xpose.msra.mxu0 0.0
        %577 = vmatprep.subr.mxu0 0.0
        %578 = vmatpush1.xpose.msra.mxu0 0.0
        %579 = vmatprep.subr.mxu0 0.0
        %580 = vmatpush1.xpose.msra.mxu0 0.0
        %581 = vmatprep.subr.mxu0 0.0
        %582 = vmatpush1.xpose.msra.mxu0 0.0
        %583 = vmatprep.subr.mxu0 0.0
        %584 = vmatpush1.xpose.msra.mxu0 0.0
        %585 = vmatprep.subr.mxu0 0.0
        %586 = vmatpush1.xpose.msra.mxu0 0.0
        %587 = vmatprep.subr.mxu0 0.0
        %588 = vmatpush1.xpose.msra.mxu0 0.0
        %589 = vmatprep.subr.mxu0 0.0
        %590 = vmatpush1.xpose.msra.mxu0 0.0
        %591 = vmatprep.mubr.f32.mxu0 0.0
        %592 = vmatmul.mubr.f32.gmra.mrb[0].mxu0 %v519
        %v593 = vpop.f32.mrb[0].mxu0
        %v594 = vadd.f32 0.0, %v593
        %v595 = vpop.f32.mrb[0].mxu0
        %596 = vdwg.mxu0
        %vm597 = vcmask 130048
        %v598 = vsel %vm597, %v594, -inf
        %599 = vmax.xlane.f32.xlu0 %v598
        %v600 = vpop.xlane.xlu0 %599
        %v601 = vsub.f32 %v594, %v600
        %v602 = vmul.f32 %v601, 1.442695
        %v603 = vpow.pop %v602
        %v604 = vsel %vm597, %v603, 0.0
        %605 = vadd.xlane.f32.xlu0 %v604
        %v606 = vpop.xlane.xlu0 %605
        %607 = vrot.lane.b32.xlu0 %v509, 96
        %v608 = vpop.permute.xlu0 %607
        %609 = vrot.lane.b32.xlu0 %v514, 96
        %v610 = vpop.permute.xlu0 %609
        %v614 = vsel %vm597, %v603, 0
        %616 = vmatprep.subr.mxu0 0.0
        %617 = vmatpush1.msra.mxu0 %v608
        %618 = vmatprep.subr.mxu0 0.0
        %619 = vmatpush1.msra.mxu0 %v610
        %620 = vmatprep.subr.mxu0 0.0
        %621 = vmatpush1.msra.mxu0 0.0
        %622 = vmatprep.subr.mxu0 0.0
        %623 = vmatpush1.msra.mxu0 0.0
        %624 = vmatprep.subr.mxu0 0.0
        %625 = vmatpush1.msra.mxu0 0.0
        %626 = vmatprep.subr.mxu0 0.0
        %627 = vmatpush1.msra.mxu0 0.0
        %628 = vmatprep.subr.mxu0 0.0
        %629 = vmatpush1.msra.mxu0 0.0
        %630 = vmatprep.subr.mxu0 0.0
        %631 = vmatpush1.msra.mxu0 0.0
        %632 = vmatprep.subr.mxu0 0.0
        %633 = vmatpush1.msra.mxu0 0.0
        %634 = vmatprep.subr.mxu0 0.0
        %635 = vmatpush1.msra.mxu0 0.0
        %636 = vmatprep.subr.mxu0 0.0
        %637 = vmatpush1.msra.mxu0 0.0
        %638 = vmatprep.subr.mxu0 0.0
        %639 = vmatpush1.msra.mxu0 0.0
        %640 = vmatprep.subr.mxu0 0.0
        %641 = vmatpush1.msra.mxu0 0.0
        %642 = vmatprep.subr.mxu0 0.0
        %643 = vmatpush1.msra.mxu0 0.0
        %644 = vmatprep.subr.mxu0 0.0
        %645 = vmatpush1.msra.mxu0 0.0
        %646 = vmatprep.subr.mxu0 0.0
        %647 = vmatpush1.msra.mxu0 0.0
        %648 = vmatprep.subr.mxu0 0.0
        %649 = vmatpush1.msra.mxu0 0.0
        %650 = vmatprep.subr.mxu0 0.0
        %651 = vmatpush1.msra.mxu0 0.0
        %652 = vmatprep.subr.mxu0 0.0
        %653 = vmatpush1.msra.mxu0 0.0
        %654 = vmatprep.subr.mxu0 0.0
        %655 = vmatpush1.msra.mxu0 0.0
        %656 = vmatprep.subr.mxu0 0.0
        %657 = vmatpush1.msra.mxu0 0.0
        %658 = vmatprep.subr.mxu0 0.0
        %659 = vmatpush1.msra.mxu0 0.0
        %660 = vmatprep.subr.mxu0 0.0
        %661 = vmatpush1.msra.mxu0 0.0
        %662 = vmatprep.subr.mxu0 0.0
        %663 = vmatpush1.msra.mxu0 0.0
        %664 = vmatprep.subr.mxu0 0.0
        %665 = vmatpush1.msra.mxu0 0.0
        %666 = vmatprep.subr.mxu0 0.0
        %667 = vmatpush1.msra.mxu0 0.0
        %668 = vmatprep.subr.mxu0 0.0
        %669 = vmatpush1.msra.mxu0 0.0
        %670 = vmatprep.subr.mxu0 0.0
        %671 = vmatpush1.msra.mxu0 0.0
        %672 = vmatprep.subr.mxu0 0.0
        %673 = vmatpush1.msra.mxu0 0.0
        %674 = vmatprep.subr.mxu0 0.0
        %675 = vmatpush1.msra.mxu0 0.0
        %676 = vmatprep.subr.mxu0 0.0
        %677 = vmatpush1.msra.mxu0 0.0
        %678 = vmatprep.subr.mxu0 0.0
        %679 = vmatpush1.msra.mxu0 0.0
        %680 = vmatprep.mubr.f32.mxu0 0.0
        %681 = vmatmul.mubr.f32.gmra.mrb[0].mxu0 %v614
        %v682 = vpop.f32.mrb[0].mxu0
        %v683 = vadd.f32 0.0, %v682
        %v684 = vpop.f32.mrb[0].mxu0
        %685 = vdwg.mxu0
        %v686 = vrcp.pop %v606
        %v687 = vmul.f32 %v683, %v686
        %688 = vrot.lane.b32.xlu0 %v424, 120
        %v689 = vpop.permute.xlu0 %688
        %690 = vrot.lane.b32.xlu0 %v509, 120
        %v691 = vpop.permute.xlu0 %690
        %692 = vrot.lane.b32.xlu0 %v514, 120
        %v693 = vpop.permute.xlu0 %692
        %v694 = vsel %vm517, %v689, 0
        %v696 = vsel %vm517, %v691, 0
        %v698 = vsel %vm517, %v693, 0
        %700 = vmatprep.subr.mxu0 0.0
        %701 = vmatpush1.xpose.msra.mxu0 %v696
        %702 = vmatprep.subr.mxu0 0.0
        %703 = vmatpush1.xpose.msra.mxu0 %v698
        %704 = vmatprep.subr.mxu0 0.0
        %705 = vmatpush1.xpose.msra.mxu0 0.0
        %706 = vmatprep.subr.mxu0 0.0
        %707 = vmatpush1.xpose.msra.mxu0 0.0
        %708 = vmatprep.subr.mxu0 0.0
        %709 = vmatpush1.xpose.msra.mxu0 0.0
        %710 = vmatprep.subr.mxu0 0.0
        %711 = vmatpush1.xpose.msra.mxu0 0.0
        %712 = vmatprep.subr.mxu0 0.0
        %713 = vmatpush1.xpose.msra.mxu0 0.0
        %714 = vmatprep.subr.mxu0 0.0
        %715 = vmatpush1.xpose.msra.mxu0 0.0
        %716 = vmatprep.subr.mxu0 0.0
        %717 = vmatpush1.xpose.msra.mxu0 0.0
        %718 = vmatprep.subr.mxu0 0.0
        %719 = vmatpush1.xpose.msra.mxu0 0.0
        %720 = vmatprep.subr.mxu0 0.0
        %721 = vmatpush1.xpose.msra.mxu0 0.0
        %722 = vmatprep.subr.mxu0 0.0
        %723 = vmatpush1.xpose.msra.mxu0 0.0
        %724 = vmatprep.subr.mxu0 0.0
        %725 = vmatpush1.xpose.msra.mxu0 0.0
        %726 = vmatprep.subr.mxu0 0.0
        %727 = vmatpush1.xpose.msra.mxu0 0.0
        %728 = vmatprep.subr.mxu0 0.0
        %729 = vmatpush1.xpose.msra.mxu0 0.0
        %730 = vmatprep.subr.mxu0 0.0
        %731 = vmatpush1.xpose.msra.mxu0 0.0
        %732 = vmatprep.subr.mxu0 0.0
        %733 = vmatpush1.xpose.msra.mxu0 0.0
        %734 = vmatprep.subr.mxu0 0.0
        %735 = vmatpush1.xpose.msra.mxu0 0.0
        %736 = vmatprep.subr.mxu0 0.0
        %737 = vmatpush1.xpose.msra.mxu0 0.0
        %738 = vmatprep.subr.mxu0 0.0
        %739 = vmatpush1.xpose.msra.mxu0 0.0
        %740 = vmatprep.subr.mxu0 0.0
        %741 = vmatpush1.xpose.msra.mxu0 0.0
        %742 = vmatprep.subr.mxu0 0.0
        %743 = vmatpush1.xpose.msra.mxu0 0.0
        %744 = vmatprep.subr.mxu0 0.0
        %745 = vmatpush1.xpose.msra.mxu0 0.0
        %746 = vmatprep.subr.mxu0 0.0
        %747 = vmatpush1.xpose.msra.mxu0 0.0
        %748 = vmatprep.subr.mxu0 0.0
        %749 = vmatpush1.xpose.msra.mxu0 0.0
        %750 = vmatprep.subr.mxu0 0.0
        %751 = vmatpush1.xpose.msra.mxu0 0.0
        %752 = vmatprep.subr.mxu0 0.0
        %753 = vmatpush1.xpose.msra.mxu0 0.0
        %754 = vmatprep.subr.mxu0 0.0
        %755 = vmatpush1.xpose.msra.mxu0 0.0
        %756 = vmatprep.subr.mxu0 0.0
        %757 = vmatpush1.xpose.msra.mxu0 0.0
        %758 = vmatprep.subr.mxu0 0.0
        %759 = vmatpush1.xpose.msra.mxu0 0.0
        %760 = vmatprep.subr.mxu0 0.0
        %761 = vmatpush1.xpose.msra.mxu0 0.0
        %762 = vmatprep.subr.mxu0 0.0
        %763 = vmatpush1.xpose.msra.mxu0 0.0
        %764 = vmatprep.mubr.f32.mxu0 0.0
        %765 = vmatmul.mubr.f32.gmra.mrb[0].mxu0 %v694
        %v766 = vpop.f32.mrb[0].mxu0
        %v767 = vadd.f32 0.0, %v766
        %v768 = vpop.f32.mrb[0].mxu0
        %769 = vdwg.mxu0
        %v770 = vsel %vm597, %v767, -inf
        %771 = vmax.xlane.f32.xlu0 %v770
        %v772 = vpop.xlane.xlu0 %771
        %v773 = vsub.f32 %v767, %v772
        %v774 = vmul.f32 %v773, 1.442695
        %v775 = vpow.pop %v774
        %v776 = vsel %vm597, %v775, 0.0
        %777 = vadd.xlane.f32.xlu0 %v776
        %v778 = vpop.xlane.xlu0 %777
        %779 = vrot.lane.b32.xlu0 %v509, 88
        %v780 = vpop.permute.xlu0 %779
        %781 = vrot.lane.b32.xlu0 %v514, 88
        %v782 = vpop.permute.xlu0 %781
        %v786 = vsel %vm597, %v775, 0
        %788 = vmatprep.subr.mxu0 0.0
        %789 = vmatpush1.msra.mxu0 %v780
        %790 = vmatprep.subr.mxu0 0.0
        %791 = vmatpush1.msra.mxu0 %v782
        %792 = vmatprep.subr.mxu0 0.0
        %793 = vmatpush1.msra.mxu0 0.0
        %794 = vmatprep.subr.mxu0 0.0
        %795 = vmatpush1.msra.mxu0 0.0
        %796 = vmatprep.subr.mxu0 0.0
        %797 = vmatpush1.msra.mxu0 0.0
        %798 = vmatprep.subr.mxu0 0.0
        %799 = vmatpush1.msra.mxu0 0.0
        %800 = vmatprep.subr.mxu0 0.0
        %801 = vmatpush1.msra.mxu0 0.0
        %802 = vmatprep.subr.mxu0 0.0
        %803 = vmatpush1.msra.mxu0 0.0
        %804 = vmatprep.subr.mxu0 0.0
        %805 = vmatpush1.msra.mxu0 0.0
        %806 = vmatprep.subr.mxu0 0.0
        %807 = vmatpush1.msra.mxu0 0.0
        %808 = vmatprep.subr.mxu0 0.0
        %809 = vmatpush1.msra.mxu0 0.0
        %810 = vmatprep.subr.mxu0 0.0
        %811 = vmatpush1.msra.mxu0 0.0
        %812 = vmatprep.subr.mxu0 0.0
        %813 = vmatpush1.msra.mxu0 0.0
        %814 = vmatprep.subr.mxu0 0.0
        %815 = vmatpush1.msra.mxu0 0.0
        %816 = vmatprep.subr.mxu0 0.0
        %817 = vmatpush1.msra.mxu0 0.0
        %818 = vmatprep.subr.mxu0 0.0
        %819 = vmatpush1.msra.mxu0 0.0
        %820 = vmatprep.subr.mxu0 0.0
        %821 = vmatpush1.msra.mxu0 0.0
        %822 = vmatprep.subr.mxu0 0.0
        %823 = vmatpush1.msra.mxu0 0.0
        %824 = vmatprep.subr.mxu0 0.0
        %825 = vmatpush1.msra.mxu0 0.0
        %826 = vmatprep.subr.mxu0 0.0
        %827 = vmatpush1.msra.mxu0 0.0
        %828 = vmatprep.subr.mxu0 0.0
        %829 = vmatpush1.msra.mxu0 0.0
        %830 = vmatprep.subr.mxu0 0.0
        %831 = vmatpush1.msra.mxu0 0.0
        %832 = vmatprep.subr.mxu0 0.0
        %833 = vmatpush1.msra.mxu0 0.0
        %834 = vmatprep.subr.mxu0 0.0
        %835 = vmatpush1.msra.mxu0 0.0
        %836 = vmatprep.subr.mxu0 0.0
        %837 = vmatpush1.msra.mxu0 0.0
        %838 = vmatprep.subr.mxu0 0.0
        %839 = vmatpush1.msra.mxu0 0.0
        %840 = vmatprep.subr.mxu0 0.0
        %841 = vmatpush1.msra.mxu0 0.0
        %842 = vmatprep.subr.mxu0 0.0
        %843 = vmatpush1.msra.mxu0 0.0
        %844 = vmatprep.subr.mxu0 0.0
        %845 = vmatpush1.msra.mxu0 0.0
        %846 = vmatprep.subr.mxu0 0.0
        %847 = vmatpush1.msra.mxu0 0.0
        %848 = vmatprep.subr.mxu0 0.0
        %849 = vmatpush1.msra.mxu0 0.0
        %850 = vmatprep.subr.mxu0 0.0
        %851 = vmatpush1.msra.mxu0 0.0
        %852 = vmatprep.mubr.f32.mxu0 0.0
        %853 = vmatmul.mubr.f32.gmra.mrb[0].mxu0 %v786
        %v854 = vpop.f32.mrb[0].mxu0
        %v855 = vadd.f32 0.0, %v854
        %v856 = vpop.f32.mrb[0].mxu0
        %857 = vdwg.mxu0
        %v858 = vrcp.pop %v778
        %v859 = vmul.f32 %v855, %v858
        %860 = vrot.lane.b32.xlu0 %v424, 112
        %v861 = vpop.permute.xlu0 %860
        %862 = vrot.lane.b32.xlu0 %v509, 112
        %v863 = vpop.permute.xlu0 %862
        %864 = vrot.lane.b32.xlu0 %v514, 112
        %v865 = vpop.permute.xlu0 %864
        %v866 = vsel %vm517, %v861, 0
        %v868 = vsel %vm517, %v863, 0
        %v870 = vsel %vm517, %v865, 0
        %872 = vmatprep.subr.mxu0 0.0
        %873 = vmatpush1.xpose.msra.mxu0 %v868
        %874 = vmatprep.subr.mxu0 0.0
        %875 = vmatpush1.xpose.msra.mxu0 %v870
        %876 = vmatprep.subr.mxu0 0.0
        %877 = vmatpush1.xpose.msra.mxu0 0.0
        %878 = vmatprep.subr.mxu0 0.0
        %879 = vmatpush1.xpose.msra.mxu0 0.0
        %880 = vmatprep.subr.mxu0 0.0
        %881 = vmatpush1.xpose.msra.mxu0 0.0
        %882 = vmatprep.subr.mxu0 0.0
        %883 = vmatpush1.xpose.msra.mxu0 0.0
        %884 = vmatprep.subr.mxu0 0.0
        %885 = vmatpush1.xpose.msra.mxu0 0.0
        %886 = vmatprep.subr.mxu0 0.0
        %887 = vmatpush1.xpose.msra.mxu0 0.0
        %888 = vmatprep.subr.mxu0 0.0
        %889 = vmatpush1.xpose.msra.mxu0 0.0
        %890 = vmatprep.subr.mxu0 0.0
        %891 = vmatpush1.xpose.msra.mxu0 0.0
        %892 = vmatprep.subr.mxu0 0.0
        %893 = vmatpush1.xpose.msra.mxu0 0.0
        %894 = vmatprep.subr.mxu0 0.0
        %895 = vmatpush1.xpose.msra.mxu0 0.0
        %896 = vmatprep.subr.mxu0 0.0
        %897 = vmatpush1.xpose.msra.mxu0 0.0
        %898 = vmatprep.subr.mxu0 0.0
        %899 = vmatpush1.xpose.msra.mxu0 0.0
        %900 = vmatprep.subr.mxu0 0.0
        %901 = vmatpush1.xpose.msra.mxu0 0.0
        %902 = vmatprep.subr.mxu0 0.0
        %903 = vmatpush1.xpose.msra.mxu0 0.0
        %904 = vmatprep.subr.mxu0 0.0
        %905 = vmatpush1.xpose.msra.mxu0 0.0
        %906 = vmatprep.subr.mxu0 0.0
        %907 = vmatpush1.xpose.msra.mxu0 0.0
        %908 = vmatprep.subr.mxu0 0.0
        %909 = vmatpush1.xpose.msra.mxu0 0.0
        %910 = vmatprep.subr.mxu0 0.0
        %911 = vmatpush1.xpose.msra.mxu0 0.0
        %912 = vmatprep.subr.mxu0 0.0
        %913 = vmatpush1.xpose.msra.mxu0 0.0
        %914 = vmatprep.subr.mxu0 0.0
        %915 = vmatpush1.xpose.msra.mxu0 0.0
        %916 = vmatprep.subr.mxu0 0.0
        %917 = vmatpush1.xpose.msra.mxu0 0.0
        %918 = vmatprep.subr.mxu0 0.0
        %919 = vmatpush1.xpose.msra.mxu0 0.0
        %920 = vmatprep.subr.mxu0 0.0
        %921 = vmatpush1.xpose.msra.mxu0 0.0
        %922 = vmatprep.subr.mxu0 0.0
        %923 = vmatpush1.xpose.msra.mxu0 0.0
        %924 = vmatprep.subr.mxu0 0.0
        %925 = vmatpush1.xpose.msra.mxu0 0.0
        %926 = vmatprep.subr.mxu0 0.0
        %927 = vmatpush1.xpose.msra.mxu0 0.0
        %928 = vmatprep.subr.mxu0 0.0
        %929 = vmatpush1.xpose.msra.mxu0 0.0
        %930 = vmatprep.subr.mxu0 0.0
        %931 = vmatpush1.xpose.msra.mxu0 0.0
        %932 = vmatprep.subr.mxu0 0.0
        %933 = vmatpush1.xpose.msra.mxu0 0.0
        %934 = vmatprep.subr.mxu0 0.0
        %935 = vmatpush1.xpose.msra.mxu0 0.0
        %936 = vmatprep.mubr.f32.mxu0 0.0
        %937 = vmatmul.mubr.f32.gmra.mrb[0].mxu0 %v866
        %v938 = vpop.f32.mrb[0].mxu0
        %v939 = vadd.f32 0.0, %v938
        %v940 = vpop.f32.mrb[0].mxu0
        %941 = vdwg.mxu0
        %v942 = vsel %vm597, %v939, -inf
        %943 = vmax.xlane.f32.xlu0 %v942
        %v944 = vpop.xlane.xlu0 %943
        %v945 = vsub.f32 %v939, %v944
        %v946 = vmul.f32 %v945, 1.442695
        %v947 = vpow.pop %v946
        %v948 = vsel %vm597, %v947, 0.0
        %949 = vadd.xlane.f32.xlu0 %v948
        %v950 = vpop.xlane.xlu0 %949
        %951 = vrot.lane.b32.xlu0 %v509, 80
        %v952 = vpop.permute.xlu0 %951
        %953 = vrot.lane.b32.xlu0 %v514, 80
        %v954 = vpop.permute.xlu0 %953
        %v958 = vsel %vm597, %v947, 0
        %960 = vmatprep.subr.mxu0 0.0
        %961 = vmatpush1.msra.mxu0 %v952
        %962 = vmatprep.subr.mxu0 0.0
        %963 = vmatpush1.msra.mxu0 %v954
        %964 = vmatprep.subr.mxu0 0.0
        %965 = vmatpush1.msra.mxu0 0.0
        %966 = vmatprep.subr.mxu0 0.0
        %967 = vmatpush1.msra.mxu0 0.0
        %968 = vmatprep.subr.mxu0 0.0
        %969 = vmatpush1.msra.mxu0 0.0
        %970 = vmatprep.subr.mxu0 0.0
        %971 = vmatpush1.msra.mxu0 0.0
        %972 = vmatprep.subr.mxu0 0.0
        %973 = vmatpush1.msra.mxu0 0.0
        %974 = vmatprep.subr.mxu0 0.0
        %975 = vmatpush1.msra.mxu0 0.0
        %976 = vmatprep.subr.mxu0 0.0
        %977 = vmatpush1.msra.mxu0 0.0
        %978 = vmatprep.subr.mxu0 0.0
        %979 = vmatpush1.msra.mxu0 0.0
        %980 = vmatprep.subr.mxu0 0.0
        %981 = vmatpush1.msra.mxu0 0.0
        %982 = vmatprep.subr.mxu0 0.0
        %983 = vmatpush1.msra.mxu0 0.0
        %984 = vmatprep.subr.mxu0 0.0
        %985 = vmatpush1.msra.mxu0 0.0
        %986 = vmatprep.subr.mxu0 0.0
        %987 = vmatpush1.msra.mxu0 0.0
        %988 = vmatprep.subr.mxu0 0.0
        %989 = vmatpush1.msra.mxu0 0.0
        %990 = vmatprep.subr.mxu0 0.0
        %991 = vmatpush1.msra.mxu0 0.0
        %992 = vmatprep.subr.mxu0 0.0
        %993 = vmatpush1.msra.mxu0 0.0
        %994 = vmatprep.subr.mxu0 0.0
        %995 = vmatpush1.msra.mxu0 0.0
        %996 = vmatprep.subr.mxu0 0.0
        %997 = vmatpush1.msra.mxu0 0.0
        %998 = vmatprep.subr.mxu0 0.0
        %999 = vmatpush1.msra.mxu0 0.0
        %1000 = vmatprep.subr.mxu0 0.0
        %1001 = vmatpush1.msra.mxu0 0.0
        %1002 = vmatprep.subr.mxu0 0.0
        %1003 = vmatpush1.msra.mxu0 0.0
        %1004 = vmatprep.subr.mxu0 0.0
        %1005 = vmatpush1.msra.mxu0 0.0
        %1006 = vmatprep.subr.mxu0 0.0
        %1007 = vmatpush1.msra.mxu0 0.0
        %1008 = vmatprep.subr.mxu0 0.0
        %1009 = vmatpush1.msra.mxu0 0.0
        %1010 = vmatprep.subr.mxu0 0.0
        %1011 = vmatpush1.msra.mxu0 0.0
        %1012 = vmatprep.subr.mxu0 0.0
        %1013 = vmatpush1.msra.mxu0 0.0
        %1014 = vmatprep.subr.mxu0 0.0
        %1015 = vmatpush1.msra.mxu0 0.0
        %1016 = vmatprep.subr.mxu0 0.0
        %1017 = vmatpush1.msra.mxu0 0.0
        %1018 = vmatprep.subr.mxu0 0.0
        %1019 = vmatpush1.msra.mxu0 0.0
        %1020 = vmatprep.subr.mxu0 0.0
        %1021 = vmatpush1.msra.mxu0 0.0
        %1022 = vmatprep.subr.mxu0 0.0
        %1023 = vmatpush1.msra.mxu0 0.0
        %1024 = vmatprep.mubr.f32.mxu0 0.0
        %1025 = vmatmul.mubr.f32.gmra.mrb[0].mxu0 %v958
        %v1026 = vpop.f32.mrb[0].mxu0
        %v1027 = vadd.f32 0.0, %v1026
        %v1028 = vpop.f32.mrb[0].mxu0
        %1029 = vdwg.mxu0
        %v1030 = vrcp.pop %v950
        %v1031 = vmul.f32 %v1027, %v1030
        %1032 = vrot.lane.b32.xlu0 %v424, 104
        %v1033 = vpop.permute.xlu0 %1032
        %1034 = vrot.lane.b32.xlu0 %v509, 104
        %v1035 = vpop.permute.xlu0 %1034
        %1036 = vrot.lane.b32.xlu0 %v514, 104
        %v1037 = vpop.permute.xlu0 %1036
        %v1038 = vsel %vm517, %v1033, 0
        %v1040 = vsel %vm517, %v1035, 0
        %v1042 = vsel %vm517, %v1037, 0
        %1044 = vmatprep.subr.mxu0 0.0
        %1045 = vmatpush1.xpose.msra.mxu0 %v1040
        %1046 = vmatprep.subr.mxu0 0.0
        %1047 = vmatpush1.xpose.msra.mxu0 %v1042
        %1048 = vmatprep.subr.mxu0 0.0
        %1049 = vmatpush1.xpose.msra.mxu0 0.0
        %1050 = vmatprep.subr.mxu0 0.0
        %1051 = vmatpush1.xpose.msra.mxu0 0.0
        %1052 = vmatprep.subr.mxu0 0.0
        %1053 = vmatpush1.xpose.msra.mxu0 0.0
        %1054 = vmatprep.subr.mxu0 0.0
        %1055 = vmatpush1.xpose.msra.mxu0 0.0
        %1056 = vmatprep.subr.mxu0 0.0
        %1057 = vmatpush1.xpose.msra.mxu0 0.0
        %1058 = vmatprep.subr.mxu0 0.0
        %1059 = vmatpush1.xpose.msra.mxu0 0.0
        %1060 = vmatprep.subr.mxu0 0.0
        %1061 = vmatpush1.xpose.msra.mxu0 0.0
        %1062 = vmatprep.subr.mxu0 0.0
        %1063 = vmatpush1.xpose.msra.mxu0 0.0
        %1064 = vmatprep.subr.mxu0 0.0
        %1065 = vmatpush1.xpose.msra.mxu0 0.0
        %1066 = vmatprep.subr.mxu0 0.0
        %1067 = vmatpush1.xpose.msra.mxu0 0.0
        %1068 = vmatprep.subr.mxu0 0.0
        %1069 = vmatpush1.xpose.msra.mxu0 0.0
        %1070 = vmatprep.subr.mxu0 0.0
        %1071 = vmatpush1.xpose.msra.mxu0 0.0
        %1072 = vmatprep.subr.mxu0 0.0
        %1073 = vmatpush1.xpose.msra.mxu0 0.0
        %1074 = vmatprep.subr.mxu0 0.0
        %1075 = vmatpush1.xpose.msra.mxu0 0.0
        %1076 = vmatprep.subr.mxu0 0.0
        %1077 = vmatpush1.xpose.msra.mxu0 0.0
        %1078 = vmatprep.subr.mxu0 0.0
        %1079 = vmatpush1.xpose.msra.mxu0 0.0
        %1080 = vmatprep.subr.mxu0 0.0
        %1081 = vmatpush1.xpose.msra.mxu0 0.0
        %1082 = vmatprep.subr.mxu0 0.0
        %1083 = vmatpush1.xpose.msra.mxu0 0.0
        %1084 = vmatprep.subr.mxu0 0.0
        %1085 = vmatpush1.xpose.msra.mxu0 0.0
        %1086 = vmatprep.subr.mxu0 0.0
        %1087 = vmatpush1.xpose.msra.mxu0 0.0
        %1088 = vmatprep.subr.mxu0 0.0
        %1089 = vmatpush1.xpose.msra.mxu0 0.0
        %1090 = vmatprep.subr.mxu0 0.0
        %1091 = vmatpush1.xpose.msra.mxu0 0.0
        %1092 = vmatprep.subr.mxu0 0.0
        %1093 = vmatpush1.xpose.msra.mxu0 0.0
        %1094 = vmatprep.subr.mxu0 0.0
        %1095 = vmatpush1.xpose.msra.mxu0 0.0
        %1096 = vmatprep.subr.mxu0 0.0
        %1097 = vmatpush1.xpose.msra.mxu0 0.0
        %1098 = vmatprep.subr.mxu0 0.0
        %1099 = vmatpush1.xpose.msra.mxu0 0.0
        %1100 = vmatprep.subr.mxu0 0.0
        %1101 = vmatpush1.xpose.msra.mxu0 0.0
        %1102 = vmatprep.subr.mxu0 0.0
        %1103 = vmatpush1.xpose.msra.mxu0 0.0
        %1104 = vmatprep.subr.mxu0 0.0
        %1105 = vmatpush1.xpose.msra.mxu0 0.0
        %1106 = vmatprep.subr.mxu0 0.0
        %1107 = vmatpush1.xpose.msra.mxu0 0.0
        %1108 = vmatprep.mubr.f32.mxu0 0.0
        %1109 = vmatmul.mubr.f32.gmra.mrb[0].mxu0 %v1038
        %v1110 = vpop.f32.mrb[0].mxu0
        %v1111 = vadd.f32 0.0, %v1110
        %v1112 = vpop.f32.mrb[0].mxu0
        %1113 = vdwg.mxu0
        %v1114 = vsel %vm597, %v1111, -inf
        %1115 = vmax.xlane.f32.xlu0 %v1114
        %v1116 = vpop.xlane.xlu0 %1115
        %v1117 = vsub.f32 %v1111, %v1116
        %v1118 = vmul.f32 %v1117, 1.442695
        %v1119 = vpow.pop %v1118
        %v1120 = vsel %vm597, %v1119, 0.0
        %1121 = vadd.xlane.f32.xlu0 %v1120
        %v1122 = vpop.xlane.xlu0 %1121
        %1123 = vrot.lane.b32.xlu0 %v509, 72
        %v1124 = vpop.permute.xlu0 %1123
        %1125 = vrot.lane.b32.xlu0 %v514, 72
        %v1126 = vpop.permute.xlu0 %1125
        %v1130 = vsel %vm597, %v1119, 0
        %1132 = vmatprep.subr.mxu0 0.0
        %1133 = vmatpush1.msra.mxu0 %v1124
        %1134 = vmatprep.subr.mxu0 0.0
        %1135 = vmatpush1.msra.mxu0 %v1126
        %1136 = vmatprep.subr.mxu0 0.0
        %1137 = vmatpush1.msra.mxu0 0.0
        %1138 = vmatprep.subr.mxu0 0.0
        %1139 = vmatpush1.msra.mxu0 0.0
        %1140 = vmatprep.subr.mxu0 0.0
        %1141 = vmatpush1.msra.mxu0 0.0
        %1142 = vmatprep.subr.mxu0 0.0
        %1143 = vmatpush1.msra.mxu0 0.0
        %1144 = vmatprep.subr.mxu0 0.0
        %1145 = vmatpush1.msra.mxu0 0.0
        %1146 = vmatprep.subr.mxu0 0.0
        %1147 = vmatpush1.msra.mxu0 0.0
        %1148 = vmatprep.subr.mxu0 0.0
        %1149 = vmatpush1.msra.mxu0 0.0
        %1150 = vmatprep.subr.mxu0 0.0
        %1151 = vmatpush1.msra.mxu0 0.0
        %1152 = vmatprep.subr.mxu0 0.0
        %1153 = vmatpush1.msra.mxu0 0.0
        %1154 = vmatprep.subr.mxu0 0.0
        %1155 = vmatpush1.msra.mxu0 0.0
        %1156 = vmatprep.subr.mxu0 0.0
        %1157 = vmatpush1.msra.mxu0 0.0
        %1158 = vmatprep.subr.mxu0 0.0
        %1159 = vmatpush1.msra.mxu0 0.0
        %1160 = vmatprep.subr.mxu0 0.0
        %1161 = vmatpush1.msra.mxu0 0.0
        %1162 = vmatprep.subr.mxu0 0.0
        %1163 = vmatpush1.msra.mxu0 0.0
        %1164 = vmatprep.subr.mxu0 0.0
        %1165 = vmatpush1.msra.mxu0 0.0
        %1166 = vmatprep.subr.mxu0 0.0
        %1167 = vmatpush1.msra.mxu0 0.0
        %1168 = vmatprep.subr.mxu0 0.0
        %1169 = vmatpush1.msra.mxu0 0.0
        %1170 = vmatprep.subr.mxu0 0.0
        %1171 = vmatpush1.msra.mxu0 0.0
        %1172 = vmatprep.subr.mxu0 0.0
        %1173 = vmatpush1.msra.mxu0 0.0
        %1174 = vmatprep.subr.mxu0 0.0
        %1175 = vmatpush1.msra.mxu0 0.0
        %1176 = vmatprep.subr.mxu0 0.0
        %1177 = vmatpush1.msra.mxu0 0.0
        %1178 = vmatprep.subr.mxu0 0.0
        %1179 = vmatpush1.msra.mxu0 0.0
        %1180 = vmatprep.subr.mxu0 0.0
        %1181 = vmatpush1.msra.mxu0 0.0
        %1182 = vmatprep.subr.mxu0 0.0
        %1183 = vmatpush1.msra.mxu0 0.0
        %1184 = vmatprep.subr.mxu0 0.0
        %1185 = vmatpush1.msra.mxu0 0.0
        %1186 = vmatprep.subr.mxu0 0.0
        %1187 = vmatpush1.msra.mxu0 0.0
        %1188 = vmatprep.subr.mxu0 0.0
        %1189 = vmatpush1.msra.mxu0 0.0
        %1190 = vmatprep.subr.mxu0 0.0
        %1191 = vmatpush1.msra.mxu0 0.0
        %1192 = vmatprep.subr.mxu0 0.0
        %1193 = vmatpush1.msra.mxu0 0.0
        %1194 = vmatprep.subr.mxu0 0.0
        %1195 = vmatpush1.msra.mxu0 0.0
        %1196 = vmatprep.mubr.f32.mxu0 0.0
        %1197 = vmatmul.mubr.f32.gmra.mrb[0].mxu0 %v1130
        %v1198 = vpop.f32.mrb[0].mxu0
        %v1199 = vadd.f32 0.0, %v1198
        %v1200 = vpop.f32.mrb[0].mxu0
        %1201 = vdwg.mxu0
        %v1202 = vrcp.pop %v1122
        %v1203 = vmul.f32 %v1199, %v1202
        %1205 = vrot.lane.b32.xlu0 %v859, 8
        %v1206 = vpop.permute.xlu0 %1205
        %1209 = vrot.lane.b32.xlu0 %v1031, 16
        %v1210 = vpop.permute.xlu0 %1209
        %1213 = vrot.lane.b32.xlu0 %v1203, 24
        %v1214 = vpop.permute.xlu0 %1213
        %v1216 = vsel %vm517, %v687, %v1206
        %v1217 = vsel %vm597, %v1216, %v1210
        %vm1218 = vcmask 195584
        %v1219 = vsel %vm1218, %v1217, %v1214
        %1220 = vst.msk [vmem:[%s335] sm:$0xff] %vm350, %v1219
        %s1221 = sand.u32 %s171, 1
        %s1222 = scalar_lea.sflag [#allocation4], %s1221
        %s1223 = sand.u32 %s171, 1
        %s1224 = smul.addr %s1223, 8
        %s1225 = scalar_lea.vmem [#allocation10], %s1224
        // Predicated region
        $region61: #{tpu_custom_call.1} parent=43 // pred_check
          %p1226 = pneg %p181
        $region62: #{tpu_custom_call.1} parent=43 // pred_check_branch
          %1228 = sbr.rel (%p1226) target = $region64
        $region63: #{tpu_custom_call.1} parent=43 // pred_region
          %s1230 = ssub.s32 128, 128
          %1231 = vsyncadd %s1222, %s1230
          %s1232 = smul.addr %s27, 128
          %s1233 = scalar_lea.hbm %s6, %s1232
          %s1235 = sshll.u32 %s1225, 4
          %s1236 = int_to_ptr.vmem [resolvable:$true] %s1235
          %1238 = dma.vmem_to_hbm [thread:$0]  %s1236, 128, %s1233, %s1222
        $region64: #{tpu_custom_call.1} parent=43 // pred_fallthru
          _
      $region44: #{tpu_custom_call.1} parent=5 // pred_fallthru
        _
      %p1239 = scmp.le.s32.totalorder 2, %s22
      // Predicated region
      $region65: #{tpu_custom_call.1} parent=5 // pred_check
        %p1240 = pneg %p1239
      $region66: #{tpu_custom_call.1} parent=5 // pred_check_branch
        %1242 = sbr.rel (%p1240) target = $region68
      $region67: #{tpu_custom_call.1} parent=5 // pred_region
        %s1243 = ssub.s32 %s22, 2
        // Predicated region
        $region69: #{tpu_custom_call.1} parent=67 // pred_check
          %p1244 = pneg %p187
        $region70: #{tpu_custom_call.1} parent=67 // pred_check_branch
          %1246 = sbr.rel (%p1244) target = $region72
        $region71: #{tpu_custom_call.1} parent=67 // pred_region
          %s1247 = sand.u32 %s172, 1
          %s1248 = scalar_lea.sflag [#allocation4], %s1247
          %s1249 = sand.u32 %s172, 1
          %s1250 = smul.addr %s1249, 8
          %s1251 = scalar_lea.vmem [#allocation10], %s1250
          %1252 = dma.done %s1248, 128
        $region72: #{tpu_custom_call.1} parent=67 // pred_fallthru
          _
      $region68: #{tpu_custom_call.1} parent=5 // pred_fallthru
        _
    $region6: #{tpu_custom_call.1} parent=1 // loop_footer
      %s26 = sadd.s32 1, %s22
    $region7: #{tpu_custom_call.1} parent=1 // loop_footer_branch
      %21 = sbr.rel target = $region3
    $region8: #{tpu_custom_call.1} parent=1 // loop_exit
      _
    %1253 = vsyncpa [#allocation3], 1
    %s1254 = scalar_lea.sflag [#allocation3], 1
    %1255 = vsyncpa %s1254, 1
    %1256 = vsyncpa [#allocation6], 1
    %s1257 = scalar_lea.sflag [#allocation6], 1
    %1258 = vsyncpa %s1257, 1
    %1259 = vsyncpa [#allocation9], 1
    %1260 = vsyncpa [#allocation4], 1
    %s1261 = scalar_lea.sflag [#allocation4], 1
    %1262 = vsyncpa %s1261, 1

</llo_original>
